<compile_context>
chip_gen: v5e
topology: v5e:2x2
jax: 0.10.0
libtpu: 0.0.40
codegen_flags: <defaults>
</compile_context>

<pallas_src>
import math

import numpy as np
import jax
import jax.numpy as jnp
from jax.experimental import pallas as pl
from jax.experimental.pallas import tpu as pltpu

EPS = 1e-5


def _vmem():
    return pl.BlockSpec(memory_space=pltpu.MemorySpace.VMEM)


# ----------------------------------------------------------------------------
# In-kernel helper: BatchNorm (batch stats, biased var, single pass) + ReLU on
# a lane-packed activation a: (R, L) f32 with columns ordered w*c + ch.
# rep: (L, L) f32 0/1 with rep[i, j] = (i % c == j % c): one MXU matmul folds
# packed column sums into per-channel sums and re-expands them to packed width
# (no lane rotates / lane replication).  gamma_p/beta_p: (1, L), pre-packed.
# ----------------------------------------------------------------------------
def _bn_relu_packed(a, rep, inv_cnt, gamma_p, beta_p):
    cs = jnp.sum(a, axis=0, keepdims=True)          # (1, L)
    cs2 = jnp.sum(a * a, axis=0, keepdims=True)     # (1, L)
    mom = jnp.dot(jnp.concatenate([cs, cs2], axis=0), rep,
                  preferred_element_type=jnp.float32) * inv_cnt   # (2, L)
    mean = mom[0:1, :]
    var = jnp.maximum(mom[1:2, :] - mean * mean, 0.0)
    scale = gamma_p * jax.lax.rsqrt(var + EPS)
    shift = beta_p - mean * scale
    return jnp.maximum(a * scale + shift, 0.0)


# ----------------------------------------------------------------------------
# Single fused ConvU kernel (gridless; everything stays in VMEM/vregs).
# ----------------------------------------------------------------------------
def _convu_kernel(x1p_ref, prevp_ref, w1_ref, w2_ref, w3p_ref, w3y_ref,
                  usel_ref, rep8_ref, rep4_ref, bn_ref, o_ref):
    n, hp, wc1 = x1p_ref.shape        # (N, H+2, (W+2)*C1in), lane-packed
    h = hp - 2                        # low-res H (= W, asserted in wrapper)
    s = 2 * h                         # high-res spatial size
    wcp = prevp_ref.shape[-1]         # (2W+2)*c2
    L1 = w1_ref.shape[-1]             # W*planes
    L2 = w2_ref.shape[-1]             # W*(planes//2)
    L3 = w3p_ref.shape[-1]            # 2W*planes
    inv_lo = 1.0 / float(n * h * h)   # per-channel count, low res
    inv_hi = 1.0 / float(n * s * s)   # per-channel count, high res

    g1 = bn_ref[0:1, 0:L1]; bt1 = bn_ref[1:2, 0:L1]
    g2 = bn_ref[2:3, 0:L2]; bt2 = bn_ref[3:4, 0:L2]
    g3 = bn_ref[4:5, 0:L3]; bt3 = bn_ref[5:6, 0:L3]

    # ---- conv1 (3x3, 2P->P): 3 per-dy banded matmuls (no lane concat),
    #      bias dropped (cancelled by BN1 mean subtraction), + BN1 + ReLU ----
    x1p = x1p_ref[...].astype(jnp.bfloat16)
    a1 = jnp.dot(x1p[:, 0:h, :].reshape(n * h, wc1), w1_ref[0],
                 preferred_element_type=jnp.float32)
    for dy in (1, 2):
        a1 = a1 + jnp.dot(x1p[:, dy:dy + h, :].reshape(n * h, wc1), w1_ref[dy],
                          preferred_element_type=jnp.float32)
    y1 = _bn_relu_packed(a1, rep8_ref[0:L1, 0:L1], inv_lo, g1, bt1)

    # ---- conv2 (1x1, P->P/2) at LOW resolution + BN2 + ReLU ----------------
    # (2x nearest upsample is exact replication => identical BN batch stats)
    a2 = jnp.dot(y1.astype(jnp.bfloat16), w2_ref[...],
                 preferred_element_type=jnp.float32)
    y2 = _bn_relu_packed(a2, rep4_ref[...], inv_lo, g2, bt2)

    # ---- conv3 (3x3, P->P): channel concat eliminated; 2x upsample + pad
    #      folded into the y-branch weights (w3y' = uw @ w3y, U = RowSel @ uh)
    prevp = prevp_ref[...].astype(jnp.bfloat16)
    y2b = y2.astype(jnp.bfloat16)
    a3 = jnp.dot(prevp[:, 0:s, :].reshape(n * s, wcp), w3p_ref[0],
                 preferred_element_type=jnp.float32)
    for dy in (1, 2):
        a3 = a3 + jnp.dot(prevp[:, dy:dy + s, :].reshape(n * s, wcp),
                          w3p_ref[dy], preferred_element_type=jnp.float32)
    for dy in range(3):
        inner = jnp.dot(y2b, w3y_ref[dy], preferred_element_type=jnp.float32)
        a3 = a3 + jnp.dot(usel_ref[dy], inner,
                          preferred_element_type=jnp.float32)

    # ---- BN3 + ReLU, lane-dense (N*2H, 2W*Cout) = (32, 128) store ----------
    o_ref[...] = _bn_relu_packed(a3, rep8_ref[...], inv_hi, g3, bt3)


# ----------------------------------------------------------------------------
# One-time (outside-jit) weight / selector preprocessing, all numpy on host.
# ----------------------------------------------------------------------------
def _band_weight_per_dy(w_hwio, in_w_padded, out_w):
    """Per-dy banded (block-Toeplitz) expansion: for each dy tap, a matrix
    mapping a packed padded row (jj*cin + ci) to packed output (w*cout + co)."""
    kh, kw, cin, cout = w_hwio.shape
    band = np.zeros((kh, in_w_padded * cin, out_w * cout), np.float32)
    for dy in range(kh):
        for dx in range(kw):
            for ow in range(out_w):
                jj = ow + dx
                band[dy, jj * cin:(jj + 1) * cin,
                     ow * cout:(ow + 1) * cout] = w_hwio[dy, dx]
    return band


def _col_upsample_selector(w, c):
    """(W*c, (2W+2)*c) 0/1: 2x nearest column upsample + zero pad, packed."""
    wi = 2 * w + 2
    uw = np.zeros((w * c, wi * c), np.float32)
    for j in range(1, 2 * w + 1):
        src = (j - 1) // 2
        for ch in range(c):
            uw[src * c + ch, j * c + ch] = 1.0
    return uw


def _row_upsample_selectors(n, h):
    """U[dy]: (N*2H, N*H) 0/1 = RowSel_dy @ uh: picks the low-res row feeding
    padded upsampled row (dy + r), or zero for the padding rows."""
    s = 2 * h
    usel = np.zeros((3, n * s, n * h), np.float32)
    for dy in range(3):
        for b in range(n):
            for r in range(s):
                i = dy + r
                if 1 <= i <= s:
                    usel[dy, b * s + r, b * h + (i - 1) // 2] = 1.0
    return usel


def _chan_rep_matrix(size, c):
    idx = np.arange(size)
    return (idx[:, None] % c == idx[None, :] % c).astype(np.float32)


def precompute_convu_constants(params, n, h, w):
    """Weights-only precompute; call ONCE, outside the per-step jit."""
    assert h == w, "lane-packed BN layout assumes square spatial dims"
    p = params['w1'].shape[-1]           # planes
    c2 = p // 2
    s = 2 * h

    w1 = np.asarray(params['w1'], np.float32)   # (3,3,2P,P) HWIO
    w2 = np.asarray(params['w2'], np.float32)   # (1,1,P,P//2)
    w3 = np.asarray(params['w3'], np.float32)   # (3,3,P,P)

    w1b = _band_weight_per_dy(w1, w + 2, w)                      # (3,(W+2)*2P, W*P)
    w2b = _band_weight_per_dy(w2, w, w)[0]                       # (W*P, W*c2)
    w3pb = _band_weight_per_dy(w3[:, :, :c2, :], s + 2, s)       # (3,(2W+2)*c2, 2W*P)
    w3yb_raw = _band_weight_per_dy(w3[:, :, c2:, :], s + 2, s)   # (3,(2W+2)*c2, 2W*P)
    uw = _col_upsample_selector(w, c2)                           # (W*c2,(2W+2)*c2)
    w3yb = np.einsum('ij,djk->dik', uw, w3yb_raw)                # (3, W*c2, 2W*P)

    usel = _row_upsample_selectors(n, h)                         # (3, N*2H, N*H)
    rep8 = _chan_rep_matrix(s * p, p)                            # (2W*P, 2W*P)
    rep4 = _chan_rep_matrix(w * c2, c2)                          # (W*c2, W*c2)

    bnp = np.zeros((6, s * p), np.float32)   # packed gamma/beta (biases dropped)
    bnp[0, :w * p] = np.tile(np.asarray(params['g1'], np.float32), w)
    bnp[1, :w * p] = np.tile(np.asarray(params['bt1'], np.float32), w)
    bnp[2, :w * c2] = np.tile(np.asarray(params['g2'], np.float32), w)
    bnp[3, :w * c2] = np.tile(np.asarray(params['bt2'], np.float32), w)
    bnp[4, :s * p] = np.tile(np.asarray(params['g3'], np.float32), s)
    bnp[5, :s * p] = np.tile(np.asarray(params['bt3'], np.float32), s)

    return dict(
        w1b=jnp.asarray(w1b, jnp.bfloat16),
        w2b=jnp.asarray(w2b, jnp.bfloat16),
        w3pb=jnp.asarray(w3pb, jnp.bfloat16),
        w3yb=jnp.asarray(w3yb, jnp.bfloat16),
        usel=jnp.asarray(usel, jnp.float32),
        rep8=jnp.asarray(rep8, jnp.float32),
        rep4=jnp.asarray(rep4, jnp.float32),
        bnp=jnp.asarray(bnp, jnp.float32),
    )


# ----------------------------------------------------------------------------
# Per-step forward (jit this). consts come from precompute_convu_constants.
# ----------------------------------------------------------------------------
def convu_forward(x_nchw, prev_nchw, consts):
    """ConvU.forward (first=False, norm='bn', weights=None, domain_label=None)."""
    x = jnp.transpose(x_nchw, (0, 2, 3, 1))        # (N, H, W, 2P)
    prev = jnp.transpose(prev_nchw, (0, 2, 3, 1))  # (N, 2H, 2W, P//2)
    n, h, w, c1in = x.shape
    assert h == w
    c2 = prev.shape[-1]
    p = 2 * c2
    s = 2 * h

    # lane-packed, pre-padded inputs
    xpad = jnp.pad(x, ((0, 0), (1, 1), (1, 1), (0, 0)))
    x1p = xpad.reshape(n, h + 2, (w + 2) * c1in)
    prevpad = jnp.pad(prev, ((0, 0), (1, 1), (1, 1), (0, 0)))
    prevp = prevpad.reshape(n, s + 2, (s + 2) * c2)

    out = pl.pallas_call(
        _convu_kernel,
        out_shape=jax.ShapeDtypeStruct((n * s, s * p), jnp.float32),
        in_specs=[_vmem()] * 10,
        out_specs=_vmem(),
    )(x1p, prevp, consts['w1b'], consts['w2b'], consts['w3pb'], consts['w3yb'],
      consts['usel'], consts['rep8'], consts['rep4'], consts['bnp'])

    # (N*2H, 2W*P) lane-dense slab -> NCHW
    out = out.reshape(n, s, s, p)
    return jnp.transpose(out, (0, 3, 1, 2))


# ----------------------------------------------------------------------------
# Pure-JAX reference (f32, HIGHEST precision, with biases) for the check.
# ----------------------------------------------------------------------------
def upsample2_nhwc(x):
    n, h, w, c = x.shape
    y = jnp.broadcast_to(x[:, :, None, :, None, :], (n, h, 2, w, 2, c))
    return y.reshape(n, 2 * h, 2 * w, c)


def _ref_conv(x, w_hwio, b, pad):
    y = jax.lax.conv_general_dilated(
        x, w_hwio, (1, 1), [(pad, pad), (pad, pad)],
        dimension_numbers=('NHWC', 'HWIO', 'NHWC'),
        precision=jax.lax.Precision.HIGHEST)
    return y + b.reshape(1, 1, 1, -1)


def _ref_bn_relu(x, g, b):
    mean = x.mean(axis=(0, 1, 2), keepdims=True)
    var = ((x - mean) ** 2).mean(axis=(0, 1, 2), keepdims=True)
    y = (x - mean) * jax.lax.rsqrt(var + EPS)
    y = y * g.reshape(1, 1, 1, -1) + b.reshape(1, 1, 1, -1)
    return jnp.maximum(y, 0.0)


def ref_forward(x_nchw, prev_nchw, p):
    x = jnp.transpose(x_nchw, (0, 2, 3, 1))
    prev = jnp.transpose(prev_nchw, (0, 2, 3, 1))
    x = _ref_bn_relu(_ref_conv(x, p['w1'], p['b1'], 1), p['g1'], p['bt1'])
    y = upsample2_nhwc(x)
    y = _ref_bn_relu(_ref_conv(y, p['w2'], p['b2'], 0), p['g2'], p['bt2'])
    y = jnp.concatenate([prev, y], axis=-1)
    y = _ref_bn_relu(_ref_conv(y, p['w3'], p['b3'], 1), p['g3'], p['bt3'])
    return jnp.transpose(y, (0, 3, 1, 2))


# ----------------------------------------------------------------------------
if __name__ == "__main__":
    P = 8            # planes
    N = 2            # batch
    H = W = 8        # spatial size of `x`; `prev` is 2H x 2W

    key = jax.random.PRNGKey(0)
    ks = jax.random.split(key, 10)

    def _init_w(k, shape, fan_in):
        return jax.random.normal(k, shape, jnp.float32) / math.sqrt(fan_in)

    params = {
        # conv1: 2P -> P, 3x3 (HWIO)
        'w1': _init_w(ks[0], (3, 3, 2 * P, P), 9 * 2 * P),
        'b1': 0.01 * jax.random.normal(ks[1], (P,), jnp.float32),
        'g1': jnp.ones((P,), jnp.float32), 'bt1': jnp.zeros((P,), jnp.float32),
        # conv2: P -> P//2, 1x1 (HWIO)
        'w2': _init_w(ks[2], (1, 1, P, P // 2), P),
        'b2': 0.01 * jax.random.normal(ks[3], (P // 2,), jnp.float32),
        'g2': jnp.ones((P // 2,), jnp.float32),
        'bt2': jnp.zeros((P // 2,), jnp.float32),
        # conv3: P -> P, 3x3 (HWIO)
        'w3': _init_w(ks[4], (3, 3, P, P), 9 * P),
        'b3': 0.01 * jax.random.normal(ks[5], (P,), jnp.float32),
        'g3': jnp.ones((P,), jnp.float32), 'bt3': jnp.zeros((P,), jnp.float32),
    }

    x = jax.random.normal(ks[6], (N, 2 * P, H, W), jnp.float32)           # NCHW
    prev = jax.random.normal(ks[7], (N, P // 2, 2 * H, 2 * W), jnp.float32)

    # One-time weight precompute (outside the per-step jit) -------------------
    # Note: conv biases are intentionally omitted; they are exactly cancelled
    # by the batch-statistics BatchNorm that follows every conv.
    consts = precompute_convu_constants(params, N, H, W)

    fwd = jax.jit(convu_forward)
    out = fwd(x, prev, consts)
    out = jax.block_until_ready(out)

    ref = ref_forward(x, prev, params)

    assert out.shape == (N, P, 2 * H, 2 * W), out.shape
    # Tolerance reflects the deliberate bf16 MXU operands (f32 accumulation);
    # the reference is f32 at HIGHEST precision and includes the (BN-cancelled)
    # conv biases.
    assert jnp.allclose(out, ref, atol=3e-2, rtol=3e-2), (
        float(jnp.max(jnp.abs(out - ref))))

    # TODO(synk): DomainSpecificBatchNorm2d / domain_label branch and the
    # external `weights` dict override are parameter-plumbing paths not
    # exercised here.
    print("KERNEL_OK")
</pallas_src>

<mosaic_0001>
module attributes {stable_mosaic.version = 11 : i64} {
  func.func @_convu_kernel(%arg0: memref<2x10x160xf32, #tpu.memory_space<vmem>>, %arg1: memref<2x18x72xf32, #tpu.memory_space<vmem>>, %arg2: memref<3x160x64xbf16, #tpu.memory_space<vmem>>, %arg3: memref<64x32xbf16, #tpu.memory_space<vmem>>, %arg4: memref<3x72x128xbf16, #tpu.memory_space<vmem>>, %arg5: memref<3x32x128xbf16, #tpu.memory_space<vmem>>, %arg6: memref<3x32x16xf32, #tpu.memory_space<vmem>>, %arg7: memref<128x128xf32, #tpu.memory_space<vmem>>, %arg8: memref<32x32xf32, #tpu.memory_space<vmem>>, %arg9: memref<6x128xf32, #tpu.memory_space<vmem>>, %arg10: memref<32x128xf32, #tpu.memory_space<vmem>>) attributes {dimension_semantics = [], scalar_prefetch = 0 : i64, scratch_operands = 0 : i64, tpu.core_type = #tpu.core_type<tc>} {
    %c0 = arith.constant 0 : index
    %c0_0 = arith.constant 0 : index
    %0 = vector.load %arg9[%c0, %c0_0] : memref<6x128xf32, #tpu.memory_space<vmem>>, vector<1x64xf32>
    %c1 = arith.constant 1 : index
    %c0_1 = arith.constant 0 : index
    %1 = vector.load %arg9[%c1, %c0_1] : memref<6x128xf32, #tpu.memory_space<vmem>>, vector<1x64xf32>
    %c2 = arith.constant 2 : index
    %c0_2 = arith.constant 0 : index
    %2 = vector.load %arg9[%c2, %c0_2] : memref<6x128xf32, #tpu.memory_space<vmem>>, vector<1x32xf32>
    %c3 = arith.constant 3 : index
    %c0_3 = arith.constant 0 : index
    %3 = vector.load %arg9[%c3, %c0_3] : memref<6x128xf32, #tpu.memory_space<vmem>>, vector<1x32xf32>
    %c4 = arith.constant 4 : index
    %c0_4 = arith.constant 0 : index
    %4 = vector.load %arg9[%c4, %c0_4] : memref<6x128xf32, #tpu.memory_space<vmem>>, vector<1x128xf32>
    %c5 = arith.constant 5 : index
    %c0_5 = arith.constant 0 : index
    %5 = vector.load %arg9[%c5, %c0_5] : memref<6x128xf32, #tpu.memory_space<vmem>>, vector<1x128xf32>
    %c0_6 = arith.constant 0 : index
    %c0_7 = arith.constant 0 : index
    %c0_8 = arith.constant 0 : index
    %6 = vector.load %arg0[%c0_6, %c0_7, %c0_8] : memref<2x10x160xf32, #tpu.memory_space<vmem>>, vector<2x10x160xf32>
    %7 = arith.truncf %6 : vector<2x10x160xf32> to vector<2x10x160xbf16>
    %8 = vector.extract_strided_slice %7 {offsets = [0, 0, 0], sizes = [2, 8, 160], strides = [1, 1, 1]} : vector<2x10x160xbf16> to vector<2x8x160xbf16>
    %9 = vector.shape_cast %8 : vector<2x8x160xbf16> to vector<16x160xbf16>
    %c0_9 = arith.constant 0 : index
    %c0_10 = arith.constant 0 : index
    %c0_11 = arith.constant 0 : index
    %10 = vector.load %arg2[%c0_9, %c0_10, %c0_11] : memref<3x160x64xbf16, #tpu.memory_space<vmem>>, vector<1x160x64xbf16>
    %11 = vector.shape_cast %10 : vector<1x160x64xbf16> to vector<160x64xbf16>
    %cst = arith.constant dense<0.000000e+00> : vector<16x64xf32>
    %12 = tpu.matmul %9, %11, %cst {dimension_numbers = #tpu.dot_dimension_numbers<[1], [0], [0], [1], [0, 0, 1, 1], [], []>} : vector<16x160xbf16>, vector<160x64xbf16>, vector<16x64xf32> -> vector<16x64xf32>
    %13 = vector.extract_strided_slice %7 {offsets = [0, 1, 0], sizes = [2, 8, 160], strides = [1, 1, 1]} : vector<2x10x160xbf16> to vector<2x8x160xbf16>
    %14 = vector.shape_cast %13 : vector<2x8x160xbf16> to vector<16x160xbf16>
    %c1_12 = arith.constant 1 : index
    %c0_13 = arith.constant 0 : index
    %c0_14 = arith.constant 0 : index
    %15 = vector.load %arg2[%c1_12, %c0_13, %c0_14] : memref<3x160x64xbf16, #tpu.memory_space<vmem>>, vector<1x160x64xbf16>
    %16 = vector.shape_cast %15 : vector<1x160x64xbf16> to vector<160x64xbf16>
    %cst_15 = arith.constant dense<0.000000e+00> : vector<16x64xf32>
    %17 = tpu.matmul %14, %16, %cst_15 {dimension_numbers = #tpu.dot_dimension_numbers<[1], [0], [0], [1], [0, 0, 1, 1], [], []>} : vector<16x160xbf16>, vector<160x64xbf16>, vector<16x64xf32> -> vector<16x64xf32>
    %18 = arith.addf %12, %17 : vector<16x64xf32>
    %19 = vector.extract_strided_slice %7 {offsets = [0, 2, 0], sizes = [2, 8, 160], strides = [1, 1, 1]} : vector<2x10x160xbf16> to vector<2x8x160xbf16>
    %20 = vector.shape_cast %19 : vector<2x8x160xbf16> to vector<16x160xbf16>
    %c2_16 = arith.constant 2 : index
    %c0_17 = arith.constant 0 : index
    %c0_18 = arith.constant 0 : index
    %21 = vector.load %arg2[%c2_16, %c0_17, %c0_18] : memref<3x160x64xbf16, #tpu.memory_space<vmem>>, vector<1x160x64xbf16>
    %22 = vector.shape_cast %21 : vector<1x160x64xbf16> to vector<160x64xbf16>
    %cst_19 = arith.constant dense<0.000000e+00> : vector<16x64xf32>
    %23 = tpu.matmul %20, %22, %cst_19 {dimension_numbers = #tpu.dot_dimension_numbers<[1], [0], [0], [1], [0, 0, 1, 1], [], []>} : vector<16x160xbf16>, vector<160x64xbf16>, vector<16x64xf32> -> vector<16x64xf32>
    %24 = arith.addf %18, %23 : vector<16x64xf32>
    %c0_20 = arith.constant 0 : index
    %c0_21 = arith.constant 0 : index
    %25 = vector.load %arg7[%c0_20, %c0_21] : memref<128x128xf32, #tpu.memory_space<vmem>>, vector<64x64xf32>
    %cst_22 = arith.constant dense<0.000000e+00> : vector<64xf32>
    %26 = vector.multi_reduction <add>, %24, %cst_22 [0] : vector<16x64xf32> to vector<64xf32>
    %27 = vector.shape_cast %26 : vector<64xf32> to vector<1x64xf32>
    %28 = arith.mulf %24, %24 : vector<16x64xf32>
    %cst_23 = arith.constant dense<0.000000e+00> : vector<64xf32>
    %29 = vector.multi_reduction <add>, %28, %cst_23 [0] : vector<16x64xf32> to vector<64xf32>
    %30 = vector.shape_cast %29 : vector<64xf32> to vector<1x64xf32>
    %31 = tpu.concatenate %27, %30 in 0 : vector<1x64xf32>, vector<1x64xf32> -> vector<2x64xf32>
    %cst_24 = arith.constant dense<0.000000e+00> : vector<2x64xf32>
    %32 = tpu.matmul %31, %25, %cst_24 {dimension_numbers = #tpu.dot_dimension_numbers<[1], [0], [0], [1], [0, 0, 1, 1], [], []>} : vector<2x64xf32>, vector<64x64xf32>, vector<2x64xf32> -> vector<2x64xf32>
    %cst_25 = arith.constant 7.812500e-03 : f32
    %33 = vector.broadcast %cst_25 : f32 to vector<2x64xf32>
    %34 = arith.mulf %32, %33 : vector<2x64xf32>
    %35 = vector.extract_strided_slice %34 {offsets = [0, 0], sizes = [1, 64], strides = [1, 1]} : vector<2x64xf32> to vector<1x64xf32>
    %36 = vector.extract_strided_slice %34 {offsets = [1, 0], sizes = [1, 64], strides = [1, 1]} : vector<2x64xf32> to vector<1x64xf32>
    %37 = arith.mulf %35, %35 : vector<1x64xf32>
    %38 = arith.subf %36, %37 : vector<1x64xf32>
    %cst_26 = arith.constant 0.000000e+00 : f32
    %39 = vector.broadcast %cst_26 : f32 to vector<1x64xf32>
    %40 = arith.maximumf %38, %39 : vector<1x64xf32>
    %cst_27 = arith.constant 9.99999974E-6 : f32
    %41 = vector.broadcast %cst_27 : f32 to vector<1x64xf32>
    %42 = arith.addf %40, %41 : vector<1x64xf32>
    %43 = math.rsqrt %42 : vector<1x64xf32>
    %44 = arith.mulf %0, %43 : vector<1x64xf32>
    %45 = arith.mulf %35, %44 : vector<1x64xf32>
    %46 = arith.subf %1, %45 : vector<1x64xf32>
    %47 = vector.broadcast %44 : vector<1x64xf32> to vector<16x64xf32>
    %48 = arith.mulf %24, %47 : vector<16x64xf32>
    %49 = vector.broadcast %46 : vector<1x64xf32> to vector<16x64xf32>
    %50 = arith.addf %48, %49 : vector<16x64xf32>
    %cst_28 = arith.constant 0.000000e+00 : f32
    %51 = vector.broadcast %cst_28 : f32 to vector<16x64xf32>
    %52 = arith.maximumf %50, %51 : vector<16x64xf32>
    %53 = arith.truncf %52 : vector<16x64xf32> to vector<16x64xbf16>
    %c0_29 = arith.constant 0 : index
    %c0_30 = arith.constant 0 : index
    %54 = vector.load %arg3[%c0_29, %c0_30] : memref<64x32xbf16, #tpu.memory_space<vmem>>, vector<64x32xbf16>
    %cst_31 = arith.constant dense<0.000000e+00> : vector<16x32xf32>
    %55 = tpu.matmul %53, %54, %cst_31 {dimension_numbers = #tpu.dot_dimension_numbers<[1], [0], [0], [1], [0, 0, 1, 1], [], []>} : vector<16x64xbf16>, vector<64x32xbf16>, vector<16x32xf32> -> vector<16x32xf32>
    %c0_32 = arith.constant 0 : index
    %c0_33 = arith.constant 0 : index
    %56 = vector.load %arg8[%c0_32, %c0_33] : memref<32x32xf32, #tpu.memory_space<vmem>>, vector<32x32xf32>
    %cst_34 = arith.constant dense<0.000000e+00> : vector<32xf32>
    %57 = vector.multi_reduction <add>, %55, %cst_34 [0] : vector<16x32xf32> to vector<32xf32>
    %58 = vector.shape_cast %57 : vector<32xf32> to vector<1x32xf32>
    %59 = arith.mulf %55, %55 : vector<16x32xf32>
    %cst_35 = arith.constant dense<0.000000e+00> : vector<32xf32>
    %60 = vector.multi_reduction <add>, %59, %cst_35 [0] : vector<16x32xf32> to vector<32xf32>
    %61 = vector.shape_cast %60 : vector<32xf32> to vector<1x32xf32>
    %62 = tpu.concatenate %58, %61 in 0 : vector<1x32xf32>, vector<1x32xf32> -> vector<2x32xf32>
    %cst_36 = arith.constant dense<0.000000e+00> : vector<2x32xf32>
    %63 = tpu.matmul %62, %56, %cst_36 {dimension_numbers = #tpu.dot_dimension_numbers<[1], [0], [0], [1], [0, 0, 1, 1], [], []>} : vector<2x32xf32>, vector<32x32xf32>, vector<2x32xf32> -> vector<2x32xf32>
    %cst_37 = arith.constant 7.812500e-03 : f32
    %64 = vector.broadcast %cst_37 : f32 to vector<2x32xf32>
    %65 = arith.mulf %63, %64 : vector<2x32xf32>
    %66 = vector.extract_strided_slice %65 {offsets = [0, 0], sizes = [1, 32], strides = [1, 1]} : vector<2x32xf32> to vector<1x32xf32>
    %67 = vector.extract_strided_slice %65 {offsets = [1, 0], sizes = [1, 32], strides = [1, 1]} : vector<2x32xf32> to vector<1x32xf32>
    %68 = arith.mulf %66, %66 : vector<1x32xf32>
    %69 = arith.subf %67, %68 : vector<1x32xf32>
    %cst_38 = arith.constant 0.000000e+00 : f32
    %70 = vector.broadcast %cst_38 : f32 to vector<1x32xf32>
    %71 = arith.maximumf %69, %70 : vector<1x32xf32>
    %cst_39 = arith.constant 9.99999974E-6 : f32
    %72 = vector.broadcast %cst_39 : f32 to vector<1x32xf32>
    %73 = arith.addf %71, %72 : vector<1x32xf32>
    %74 = math.rsqrt %73 : vector<1x32xf32>
    %75 = arith.mulf %2, %74 : vector<1x32xf32>
    %76 = arith.mulf %66, %75 : vector<1x32xf32>
    %77 = arith.subf %3, %76 : vector<1x32xf32>
    %78 = vector.broadcast %75 : vector<1x32xf32> to vector<16x32xf32>
    %79 = arith.mulf %55, %78 : vector<16x32xf32>
    %80 = vector.broadcast %77 : vector<1x32xf32> to vector<16x32xf32>
    %81 = arith.addf %79, %80 : vector<16x32xf32>
    %cst_40 = arith.constant 0.000000e+00 : f32
    %82 = vector.broadcast %cst_40 : f32 to vector<16x32xf32>
    %83 = arith.maximumf %81, %82 : vector<16x32xf32>
    %c0_41 = arith.constant 0 : index
    %c0_42 = arith.constant 0 : index
    %c0_43 = arith.constant 0 : index
    %84 = vector.load %arg1[%c0_41, %c0_42, %c0_43] : memref<2x18x72xf32, #tpu.memory_space<vmem>>, vector<2x18x72xf32>
    %85 = arith.truncf %84 : vector<2x18x72xf32> to vector<2x18x72xbf16>
    %86 = arith.truncf %83 : vector<16x32xf32> to vector<16x32xbf16>
    %87 = vector.extract_strided_slice %85 {offsets = [0, 0, 0], sizes = [2, 16, 72], strides = [1, 1, 1]} : vector<2x18x72xbf16> to vector<2x16x72xbf16>
    %88 = vector.shape_cast %87 : vector<2x16x72xbf16> to vector<32x72xbf16>
    %c0_44 = arith.constant 0 : index
    %c0_45 = arith.constant 0 : index
    %c0_46 = arith.constant 0 : index
    %89 = vector.load %arg4[%c0_44, %c0_45, %c0_46] : memref<3x72x128xbf16, #tpu.memory_space<vmem>>, vector<1x72x128xbf16>
    %90 = vector.shape_cast %89 : vector<1x72x128xbf16> to vector<72x128xbf16>
    %cst_47 = arith.constant dense<0.000000e+00> : vector<32x128xf32>
    %91 = tpu.matmul %88, %90, %cst_47 {dimension_numbers = #tpu.dot_dimension_numbers<[1], [0], [0], [1], [0, 0, 1, 1], [], []>} : vector<32x72xbf16>, vector<72x128xbf16>, vector<32x128xf32> -> vector<32x128xf32>
    %92 = vector.extract_strided_slice %85 {offsets = [0, 1, 0], sizes = [2, 16, 72], strides = [1, 1, 1]} : vector<2x18x72xbf16> to vector<2x16x72xbf16>
    %93 = vector.shape_cast %92 : vector<2x16x72xbf16> to vector<32x72xbf16>
    %c1_48 = arith.constant 1 : index
    %c0_49 = arith.constant 0 : index
    %c0_50 = arith.constant 0 : index
    %94 = vector.load %arg4[%c1_48, %c0_49, %c0_50] : memref<3x72x128xbf16, #tpu.memory_space<vmem>>, vector<1x72x128xbf16>
    %95 = vector.shape_cast %94 : vector<1x72x128xbf16> to vector<72x128xbf16>
    %cst_51 = arith.constant dense<0.000000e+00> : vector<32x128xf32>
    %96 = tpu.matmul %93, %95, %cst_51 {dimension_numbers = #tpu.dot_dimension_numbers<[1], [0], [0], [1], [0, 0, 1, 1], [], []>} : vector<32x72xbf16>, vector<72x128xbf16>, vector<32x128xf32> -> vector<32x128xf32>
    %97 = arith.addf %91, %96 : vector<32x128xf32>
    %98 = vector.extract_strided_slice %85 {offsets = [0, 2, 0], sizes = [2, 16, 72], strides = [1, 1, 1]} : vector<2x18x72xbf16> to vector<2x16x72xbf16>
    %99 = vector.shape_cast %98 : vector<2x16x72xbf16> to vector<32x72xbf16>
    %c2_52 = arith.constant 2 : index
    %c0_53 = arith.constant 0 : index
    %c0_54 = arith.constant 0 : index
    %100 = vector.load %arg4[%c2_52, %c0_53, %c0_54] : memref<3x72x128xbf16, #tpu.memory_space<vmem>>, vector<1x72x128xbf16>
    %101 = vector.shape_cast %100 : vector<1x72x128xbf16> to vector<72x128xbf16>
    %cst_55 = arith.constant dense<0.000000e+00> : vector<32x128xf32>
    %102 = tpu.matmul %99, %101, %cst_55 {dimension_numbers = #tpu.dot_dimension_numbers<[1], [0], [0], [1], [0, 0, 1, 1], [], []>} : vector<32x72xbf16>, vector<72x128xbf16>, vector<32x128xf32> -> vector<32x128xf32>
    %103 = arith.addf %97, %102 : vector<32x128xf32>
    %c0_56 = arith.constant 0 : index
    %c0_57 = arith.constant 0 : index
    %c0_58 = arith.constant 0 : index
    %104 = vector.load %arg5[%c0_56, %c0_57, %c0_58] : memref<3x32x128xbf16, #tpu.memory_space<vmem>>, vector<1x32x128xbf16>
    %105 = vector.shape_cast %104 : vector<1x32x128xbf16> to vector<32x128xbf16>
    %cst_59 = arith.constant dense<0.000000e+00> : vector<16x128xf32>
    %106 = tpu.matmul %86, %105, %cst_59 {dimension_numbers = #tpu.dot_dimension_numbers<[1], [0], [0], [1], [0, 0, 1, 1], [], []>} : vector<16x32xbf16>, vector<32x128xbf16>, vector<16x128xf32> -> vector<16x128xf32>
    %c0_60 = arith.constant 0 : index
    %c0_61 = arith.constant 0 : index
    %c0_62 = arith.constant 0 : index
    %107 = vector.load %arg6[%c0_60, %c0_61, %c0_62] : memref<3x32x16xf32, #tpu.memory_space<vmem>>, vector<1x32x16xf32>
    %108 = vector.shape_cast %107 : vector<1x32x16xf32> to vector<32x16xf32>
    %cst_63 = arith.constant dense<0.000000e+00> : vector<32x128xf32>
    %109 = tpu.matmul %108, %106, %cst_63 {dimension_numbers = #tpu.dot_dimension_numbers<[1], [0], [0], [1], [0, 0, 1, 1], [], []>} : vector<32x16xf32>, vector<16x128xf32>, vector<32x128xf32> -> vector<32x128xf32>
    %110 = arith.addf %103, %109 : vector<32x128xf32>
    %c1_64 = arith.constant 1 : index
    %c0_65 = arith.constant 0 : index
    %c0_66 = arith.constant 0 : index
    %111 = vector.load %arg5[%c1_64, %c0_65, %c0_66] : memref<3x32x128xbf16, #tpu.memory_space<vmem>>, vector<1x32x128xbf16>
    %112 = vector.shape_cast %111 : vector<1x32x128xbf16> to vector<32x128xbf16>
    %cst_67 = arith.constant dense<0.000000e+00> : vector<16x128xf32>
    %113 = tpu.matmul %86, %112, %cst_67 {dimension_numbers = #tpu.dot_dimension_numbers<[1], [0], [0], [1], [0, 0, 1, 1], [], []>} : vector<16x32xbf16>, vector<32x128xbf16>, vector<16x128xf32> -> vector<16x128xf32>
    %c1_68 = arith.constant 1 : index
    %c0_69 = arith.constant 0 : index
    %c0_70 = arith.constant 0 : index
    %114 = vector.load %arg6[%c1_68, %c0_69, %c0_70] : memref<3x32x16xf32, #tpu.memory_space<vmem>>, vector<1x32x16xf32>
    %115 = vector.shape_cast %114 : vector<1x32x16xf32> to vector<32x16xf32>
    %cst_71 = arith.constant dense<0.000000e+00> : vector<32x128xf32>
    %116 = tpu.matmul %115, %113, %cst_71 {dimension_numbers = #tpu.dot_dimension_numbers<[1], [0], [0], [1], [0, 0, 1, 1], [], []>} : vector<32x16xf32>, vector<16x128xf32>, vector<32x128xf32> -> vector<32x128xf32>
    %117 = arith.addf %110, %116 : vector<32x128xf32>
    %c2_72 = arith.constant 2 : index
    %c0_73 = arith.constant 0 : index
    %c0_74 = arith.constant 0 : index
    %118 = vector.load %arg5[%c2_72, %c0_73, %c0_74] : memref<3x32x128xbf16, #tpu.memory_space<vmem>>, vector<1x32x128xbf16>
    %119 = vector.shape_cast %118 : vector<1x32x128xbf16> to vector<32x128xbf16>
    %cst_75 = arith.constant dense<0.000000e+00> : vector<16x128xf32>
    %120 = tpu.matmul %86, %119, %cst_75 {dimension_numbers = #tpu.dot_dimension_numbers<[1], [0], [0], [1], [0, 0, 1, 1], [], []>} : vector<16x32xbf16>, vector<32x128xbf16>, vector<16x128xf32> -> vector<16x128xf32>
    %c2_76 = arith.constant 2 : index
    %c0_77 = arith.constant 0 : index
    %c0_78 = arith.constant 0 : index
    %121 = vector.load %arg6[%c2_76, %c0_77, %c0_78] : memref<3x32x16xf32, #tpu.memory_space<vmem>>, vector<1x32x16xf32>
    %122 = vector.shape_cast %121 : vector<1x32x16xf32> to vector<32x16xf32>
    %cst_79 = arith.constant dense<0.000000e+00> : vector<32x128xf32>
    %123 = tpu.matmul %122, %120, %cst_79 {dimension_numbers = #tpu.dot_dimension_numbers<[1], [0], [0], [1], [0, 0, 1, 1], [], []>} : vector<32x16xf32>, vector<16x128xf32>, vector<32x128xf32> -> vector<32x128xf32>
    %124 = arith.addf %117, %123 : vector<32x128xf32>
    %c0_80 = arith.constant 0 : index
    %c0_81 = arith.constant 0 : index
    %125 = vector.load %arg7[%c0_80, %c0_81] : memref<128x128xf32, #tpu.memory_space<vmem>>, vector<128x128xf32>
    %cst_82 = arith.constant dense<0.000000e+00> : vector<128xf32>
    %126 = vector.multi_reduction <add>, %124, %cst_82 [0] : vector<32x128xf32> to vector<128xf32>
    %127 = vector.shape_cast %126 : vector<128xf32> to vector<1x128xf32>
    %128 = arith.mulf %124, %124 : vector<32x128xf32>
    %cst_83 = arith.constant dense<0.000000e+00> : vector<128xf32>
    %129 = vector.multi_reduction <add>, %128, %cst_83 [0] : vector<32x128xf32> to vector<128xf32>
    %130 = vector.shape_cast %129 : vector<128xf32> to vector<1x128xf32>
    %131 = tpu.concatenate %127, %130 in 0 : vector<1x128xf32>, vector<1x128xf32> -> vector<2x128xf32>
    %cst_84 = arith.constant dense<0.000000e+00> : vector<2x128xf32>
    %132 = tpu.matmul %131, %125, %cst_84 {dimension_numbers = #tpu.dot_dimension_numbers<[1], [0], [0], [1], [0, 0, 1, 1], [], []>} : vector<2x128xf32>, vector<128x128xf32>, vector<2x128xf32> -> vector<2x128xf32>
    %cst_85 = arith.constant 0.001953125 : f32
    %133 = vector.broadcast %cst_85 : f32 to vector<2x128xf32>
    %134 = arith.mulf %132, %133 : vector<2x128xf32>
    %135 = vector.extract_strided_slice %134 {offsets = [0, 0], sizes = [1, 128], strides = [1, 1]} : vector<2x128xf32> to vector<1x128xf32>
    %136 = vector.extract_strided_slice %134 {offsets = [1, 0], sizes = [1, 128], strides = [1, 1]} : vector<2x128xf32> to vector<1x128xf32>
    %137 = arith.mulf %135, %135 : vector<1x128xf32>
    %138 = arith.subf %136, %137 : vector<1x128xf32>
    %cst_86 = arith.constant 0.000000e+00 : f32
    %139 = vector.broadcast %cst_86 : f32 to vector<1x128xf32>
    %140 = arith.maximumf %138, %139 : vector<1x128xf32>
    %cst_87 = arith.constant 9.99999974E-6 : f32
    %141 = vector.broadcast %cst_87 : f32 to vector<1x128xf32>
    %142 = arith.addf %140, %141 : vector<1x128xf32>
    %143 = math.rsqrt %142 : vector<1x128xf32>
    %144 = arith.mulf %4, %143 : vector<1x128xf32>
    %145 = arith.mulf %135, %144 : vector<1x128xf32>
    %146 = arith.subf %5, %145 : vector<1x128xf32>
    %147 = vector.broadcast %144 : vector<1x128xf32> to vector<32x128xf32>
    %148 = arith.mulf %124, %147 : vector<32x128xf32>
    %149 = vector.broadcast %146 : vector<1x128xf32> to vector<32x128xf32>
    %150 = arith.addf %148, %149 : vector<32x128xf32>
    %cst_88 = arith.constant 0.000000e+00 : f32
    %151 = vector.broadcast %cst_88 : f32 to vector<32x128xf32>
    %152 = arith.maximumf %150, %151 : vector<32x128xf32>
    %c0_89 = arith.constant 0 : index
    %c0_90 = arith.constant 0 : index
    %153 = vector.load %arg10[%c0_89, %c0_90] : memref<32x128xf32, #tpu.memory_space<vmem>>, vector<32x128xf32>
    tpu.vector_store %arg10[%c0_89, %c0_90], %152 {strides = array<i32>} : memref<32x128xf32, #tpu.memory_space<vmem>>, vector<32x128xf32>,
    return
  }
}

</mosaic_0001>

<llo_original>
// kernel: convu_forward.1
$region0: #{convu_forward.1}
  #allocation0 [shape = 'u32[]', space=smem, size = 0x4, offset = 0x4, fixed_abs, tag = 'smem constant byte address 0x4 - core index']
  #allocation1 [shape = 'u32[72,128]{1,0:T(1,128)}', space=vmem, size = 0x9000, scoped, tag = 'internal scratch']
  %s0 = inlined_call_operand.vmem [shape: f32[2,10,160], index: 0, kind: input, shape index: {}]
  %s1 = inlined_call_operand.vmem [shape: f32[2,18,72], index: 1, kind: input, shape index: {}]
  %s2 = inlined_call_operand.vmem [shape: bf16[3,160,64], index: 2, kind: input, shape index: {}]
  %s3 = inlined_call_operand.vmem [shape: bf16[64,32], index: 3, kind: input, shape index: {}]
  %s4 = inlined_call_operand.vmem [shape: bf16[3,72,128], index: 4, kind: input, shape index: {}]
  %s5 = inlined_call_operand.vmem [shape: bf16[3,32,128], index: 5, kind: input, shape index: {}]
  %s6 = inlined_call_operand.vmem [shape: f32[3,32,16], index: 6, kind: input, shape index: {}]
  %s7 = inlined_call_operand.vmem [shape: f32[128,128], index: 7, kind: input, shape index: {}]
  %s8 = inlined_call_operand.vmem [shape: f32[32,32], index: 8, kind: input, shape index: {}]
  %s9 = inlined_call_operand.vmem [shape: f32[6,128], index: 9, kind: input, shape index: {}]
  %s10 = inlined_call_operand.vmem [shape: f32[32,128], index: 10, kind: output, shape index: {}]
  %s11 = sld [smem:[#allocation0]]
  $region50: #{convu_forward.1} parent=0
    _
  %s13 = ssub.s32 1, %s11
  %s14 = scalar_select 0, %s13, %s11
  // Predicated region
  $region2: #{convu_forward.1} parent=0 // pred_check
    _
  $region3: #{convu_forward.1} parent=0 // pred_check_branch
    %16 = sbr.rel (0) target = $region5
  $region4: #{convu_forward.1} parent=0 // pred_region
    _
  $region5: #{convu_forward.1} parent=0 // pred_fallthru
    _
  // Predicated region
  $region6: #{convu_forward.1} parent=0 // pred_check
    _
  $region7: #{convu_forward.1} parent=0 // pred_check_branch
    %18 = sbr.rel (0) target = $region9
  $region8: #{convu_forward.1} parent=0 // pred_region
    _
  $region9: #{convu_forward.1} parent=0 // pred_fallthru
    _
  // Predicated region
  $region10: #{convu_forward.1} parent=0 // pred_check
    _
  $region11: #{convu_forward.1} parent=0 // pred_check_branch
    %20 = sbr.rel (0) target = $region13
  $region12: #{convu_forward.1} parent=0 // pred_region
    _
  $region13: #{convu_forward.1} parent=0 // pred_fallthru
    _
  // Predicated region
  $region14: #{convu_forward.1} parent=0 // pred_check
    _
  $region15: #{convu_forward.1} parent=0 // pred_check_branch
    %22 = sbr.rel (0) target = $region17
  $region16: #{convu_forward.1} parent=0 // pred_region
    _
  $region17: #{convu_forward.1} parent=0 // pred_fallthru
    _
  // Predicated region
  $region18: #{convu_forward.1} parent=0 // pred_check
    _
  $region19: #{convu_forward.1} parent=0 // pred_check_branch
    %24 = sbr.rel (0) target = $region21
  $region20: #{convu_forward.1} parent=0 // pred_region
    _
  $region21: #{convu_forward.1} parent=0 // pred_fallthru
    _
  // Predicated region
  $region22: #{convu_forward.1} parent=0 // pred_check
    _
  $region23: #{convu_forward.1} parent=0 // pred_check_branch
    %26 = sbr.rel (0) target = $region25
  $region24: #{convu_forward.1} parent=0 // pred_region
    _
  $region25: #{convu_forward.1} parent=0 // pred_fallthru
    _
  // Predicated region
  $region26: #{convu_forward.1} parent=0 // pred_check
    _
  $region27: #{convu_forward.1} parent=0 // pred_check_branch
    %28 = sbr.rel (0) target = $region29
  $region28: #{convu_forward.1} parent=0 // pred_region
    _
  $region29: #{convu_forward.1} parent=0 // pred_fallthru
    _
  // Predicated region
  $region30: #{convu_forward.1} parent=0 // pred_check
    _
  $region31: #{convu_forward.1} parent=0 // pred_check_branch
    %30 = sbr.rel (0) target = $region33
  $region32: #{convu_forward.1} parent=0 // pred_region
    _
  $region33: #{convu_forward.1} parent=0 // pred_fallthru
    _
  // Predicated region
  $region34: #{convu_forward.1} parent=0 // pred_check
    _
  $region35: #{convu_forward.1} parent=0 // pred_check_branch
    %32 = sbr.rel (0) target = $region37
  $region36: #{convu_forward.1} parent=0 // pred_region
    _
  $region37: #{convu_forward.1} parent=0 // pred_fallthru
    _
  // Predicated region
  $region38: #{convu_forward.1} parent=0 // pred_check
    _
  $region39: #{convu_forward.1} parent=0 // pred_check_branch
    %34 = sbr.rel (0) target = $region41
  $region40: #{convu_forward.1} parent=0 // pred_region
    _
  $region41: #{convu_forward.1} parent=0 // pred_fallthru
    _
  %v36 = vld [vmem:[%s9] sm:$0x1]
  %v37 = vld [vmem:[%s9 + $0x1] sm:$0x1]
  %v38 = vld [vmem:[%s9 + $0x2] sm:$0x1]
  %v39 = vld [vmem:[%s9 + $0x3] sm:$0x1]
  %v40 = vld [vmem:[%s9 + $0x4] sm:$0x1]
  %v41 = vld [vmem:[%s9 + $0x5] sm:$0x1]
  %v42 = vld [vmem:[%s0] sm:$0xff]
  %v43 = vld [vmem:[%s0 + $0x8] sm:$0xff]
  %v44 = vld [vmem:[%s0 + $0x10] sm:$0x3]
  %v45 = vld [vmem:[%s0 + $0x18] sm:$0x3]
  %v46 = vld [vmem:[%s0 + $0x20] sm:$0xff]
  %v47 = vld [vmem:[%s0 + $0x28] sm:$0xff]
  %v48 = vld [vmem:[%s0 + $0x30] sm:$0x3]
  %v49 = vld [vmem:[%s0 + $0x38] sm:$0x3]
  %v50 = vpack.c.bf16 %v43, %v42
  %v51 = vpack.c.bf16 %v45, %v44
  %v52 = vpack.c.bf16 %v47, %v46
  %v53 = vpack.c.bf16 %v49, %v48
  %v54 = vld [vmem:[%s2] sm:$0xf]
  %v55 = vld [vmem:[%s2 + $0x4] sm:$0xf]
  %v56 = vld [vmem:[%s2 + $0x8] sm:$0xf]
  %v57 = vld [vmem:[%s2 + $0xc] sm:$0xf]
  %v58 = vld [vmem:[%s2 + $0x10] sm:$0xf]
  %v59 = vld [vmem:[%s2 + $0x14] sm:$0xf]
  %v60 = vld [vmem:[%s2 + $0x18] sm:$0xf]
  %v61 = vld [vmem:[%s2 + $0x1c] sm:$0xf]
  %v62 = vld [vmem:[%s2 + $0x20] sm:$0xf]
  %v63 = vld [vmem:[%s2 + $0x24] sm:$0xf]
  %v64 = vld [vmem:[%s2 + $0x28] sm:$0xf]
  %v65 = vld [vmem:[%s2 + $0x2c] sm:$0xf]
  %v66 = vld [vmem:[%s2 + $0x30] sm:$0xf]
  %v67 = vld [vmem:[%s2 + $0x34] sm:$0xf]
  %v68 = vld [vmem:[%s2 + $0x38] sm:$0xf]
  %v69 = vld [vmem:[%s2 + $0x3c] sm:$0xf]
  %v70 = vld [vmem:[%s2 + $0x40] sm:$0xf]
  %v71 = vld [vmem:[%s2 + $0x44] sm:$0xf]
  %v72 = vld [vmem:[%s2 + $0x48] sm:$0xf]
  %v73 = vld [vmem:[%s2 + $0x4c] sm:$0xf]
  %vm74 = vsmask.f32 3328
  %vm75 = vsmask.f32 7440
  %vm76 = vmor %vm74, %vm75
  %v78 = vshrl.u32 %v50, 16
  %v80 = vrot.slane %v78, 4
  %v81 = vshll.u32 %v50, 16
  %v83 = vrot.slane %v81, 5
  %v84 = vor.u32 %v80, %v83
  %v85 = vrot.slane %v84, 4
  %v87 = vshll.u32 %v51, 16
  %v89 = vrot.slane %v87, 5
  %v90 = vsel %vm76, %v85, %v89
  %v92 = vshrl.u32 %v52, 16
  %v94 = vrot.slane %v92, 4
  %v95 = vshll.u32 %v52, 16
  %v97 = vrot.slane %v95, 5
  %v98 = vor.u32 %v94, %v97
  %v99 = vrot.slane %v98, 4
  %v101 = vshll.u32 %v53, 16
  %v103 = vrot.slane %v101, 5
  %v104 = vsel %vm76, %v99, %v103
  %s105 = scalar_lea.vmem %s2, 80
  %v106 = vld [vmem:[%s105] sm:$0xf]
  %v107 = vld [vmem:[%s105 + $0x4] sm:$0xf]
  %v108 = vld [vmem:[%s105 + $0x8] sm:$0xf]
  %v109 = vld [vmem:[%s105 + $0xc] sm:$0xf]
  %v110 = vld [vmem:[%s105 + $0x10] sm:$0xf]
  %v111 = vld [vmem:[%s105 + $0x14] sm:$0xf]
  %v112 = vld [vmem:[%s105 + $0x18] sm:$0xf]
  %v113 = vld [vmem:[%s105 + $0x1c] sm:$0xf]
  %v114 = vld [vmem:[%s105 + $0x20] sm:$0xf]
  %v115 = vld [vmem:[%s105 + $0x24] sm:$0xf]
  %v116 = vld [vmem:[%s105 + $0x28] sm:$0xf]
  %v117 = vld [vmem:[%s105 + $0x2c] sm:$0xf]
  %v118 = vld [vmem:[%s105 + $0x30] sm:$0xf]
  %v119 = vld [vmem:[%s105 + $0x34] sm:$0xf]
  %v120 = vld [vmem:[%s105 + $0x38] sm:$0xf]
  %v121 = vld [vmem:[%s105 + $0x3c] sm:$0xf]
  %v122 = vld [vmem:[%s105 + $0x40] sm:$0xf]
  %v123 = vld [vmem:[%s105 + $0x44] sm:$0xf]
  %v124 = vld [vmem:[%s105 + $0x48] sm:$0xf]
  %v125 = vld [vmem:[%s105 + $0x4c] sm:$0xf]
  %v126 = vunpack.c.l.b16 %v90
  %v127 = vunpack.c.h.b16 %v90
  %v128 = vunpack.c.l.b16 %v104
  %v129 = vunpack.c.h.b16 %v104
  %v130 = vpack.c.b16 %v128, %v126
  %v131 = vpack.c.b16 %v129, %v127
  %v153 = vunpack.c.l.b16 %v106
  %v154 = vunpack.c.l.b16 %v107
  %v155 = vunpack.c.l.b16 %v108
  %v156 = vunpack.c.l.b16 %v109
  %v157 = vunpack.c.l.b16 %v110
  %v158 = vunpack.c.l.b16 %v111
  %v159 = vunpack.c.l.b16 %v112
  %v160 = vunpack.c.l.b16 %v113
  %v161 = vunpack.c.l.b16 %v114
  %v162 = vunpack.c.l.b16 %v115
  %v163 = vunpack.c.l.b16 %v116
  %v164 = vunpack.c.l.b16 %v117
  %v165 = vunpack.c.l.b16 %v118
  %v166 = vunpack.c.l.b16 %v119
  %v167 = vunpack.c.l.b16 %v120
  %v168 = vunpack.c.l.b16 %v121
  %v169 = vunpack.c.l.b16 %v122
  %v170 = vunpack.c.l.b16 %v123
  %v171 = vunpack.c.l.b16 %v124
  %v172 = vunpack.c.l.b16 %v125
  %v173 = vpack.c.b16 %v154, %v153
  %v174 = vpack.c.b16 %v156, %v155
  %v175 = vpack.c.b16 %v158, %v157
  %v176 = vpack.c.b16 %v160, %v159
  %v177 = vpack.c.b16 %v162, %v161
  %v178 = vpack.c.b16 %v164, %v163
  %v179 = vpack.c.b16 %v166, %v165
  %v180 = vpack.c.b16 %v168, %v167
  %v181 = vpack.c.b16 %v170, %v169
  %v182 = vpack.c.b16 %v172, %v171
  %vm193 = vcmask 261120
  %v195 = vsel %vm193, %v131, 0
  %197 = vmatpush.bf16.msra.mxu0 %v180
  %198 = vmatpush.bf16.msra.mxu0 %v179
  %199 = vmatpush.bf16.msra.mxu0 %v178
  %200 = vmatpush.bf16.msra.mxu0 %v177
  %201 = vmatpush.bf16.msra.mxu0 %v176
  %202 = vmatpush.bf16.msra.mxu0 %v175
  %203 = vmatpush.bf16.msra.mxu0 %v174
  %204 = vmatpush.bf16.msra.mxu0 %v173
  %205 = vmatmul.bf16.gmra.mxu0 %v130
  %v206 = vpop.f32.mrf.mxu0
  %v207 = vadd.f32 0.0, %v206
  %v208 = vpop.f32.mrf.mxu0
  %v209 = vadd.f32 0.0, %v208
  %210 = vdwg.mxu0
  %211 = vmatpush.bf16.msra.mxu0 0
  %212 = vmatpush.bf16.msra.mxu0 0
  %213 = vmatpush.bf16.msra.mxu0 0
  %214 = vmatpush.bf16.msra.mxu0 0
  %215 = vmatpush.bf16.msra.mxu0 0
  %216 = vmatpush.bf16.msra.mxu0 0
  %217 = vmatpush.bf16.msra.mxu0 %v182
  %218 = vmatpush.bf16.msra.mxu0 %v181
  %219 = vmatmul.bf16.gmra.mxu0 %v195
  %v220 = vpop.f32.mrf.mxu0
  %v221 = vadd.f32 %v207, %v220
  %v222 = vpop.f32.mrf.mxu0
  %v223 = vadd.f32 %v209, %v222
  %224 = vdwg.mxu0
  %v227 = vunpack.c.l.b16 %v50
  %v228 = vunpack.c.h.b16 %v50
  %v229 = vunpack.c.l.b16 %v52
  %v230 = vunpack.c.h.b16 %v52
  %v231 = vpack.c.b16 %v229, %v227
  %v232 = vpack.c.b16 %v230, %v228
  %v254 = vunpack.c.l.b16 %v54
  %v255 = vunpack.c.l.b16 %v55
  %v256 = vunpack.c.l.b16 %v56
  %v257 = vunpack.c.l.b16 %v57
  %v258 = vunpack.c.l.b16 %v58
  %v259 = vunpack.c.l.b16 %v59
  %v260 = vunpack.c.l.b16 %v60
  %v261 = vunpack.c.l.b16 %v61
  %v262 = vunpack.c.l.b16 %v62
  %v263 = vunpack.c.l.b16 %v63
  %v264 = vunpack.c.l.b16 %v64
  %v265 = vunpack.c.l.b16 %v65
  %v266 = vunpack.c.l.b16 %v66
  %v267 = vunpack.c.l.b16 %v67
  %v268 = vunpack.c.l.b16 %v68
  %v269 = vunpack.c.l.b16 %v69
  %v270 = vunpack.c.l.b16 %v70
  %v271 = vunpack.c.l.b16 %v71
  %v272 = vunpack.c.l.b16 %v72
  %v273 = vunpack.c.l.b16 %v73
  %v274 = vpack.c.b16 %v255, %v254
  %v275 = vpack.c.b16 %v257, %v256
  %v276 = vpack.c.b16 %v259, %v258
  %v277 = vpack.c.b16 %v261, %v260
  %v278 = vpack.c.b16 %v263, %v262
  %v279 = vpack.c.b16 %v265, %v264
  %v280 = vpack.c.b16 %v267, %v266
  %v281 = vpack.c.b16 %v269, %v268
  %v282 = vpack.c.b16 %v271, %v270
  %v283 = vpack.c.b16 %v273, %v272
  %v295 = vsel %vm193, %v232, 0
  %297 = vmatpush.bf16.msra.mxu0 %v281
  %298 = vmatpush.bf16.msra.mxu0 %v280
  %299 = vmatpush.bf16.msra.mxu0 %v279
  %300 = vmatpush.bf16.msra.mxu0 %v278
  %301 = vmatpush.bf16.msra.mxu0 %v277
  %302 = vmatpush.bf16.msra.mxu0 %v276
  %303 = vmatpush.bf16.msra.mxu0 %v275
  %304 = vmatpush.bf16.msra.mxu0 %v274
  %305 = vmatmul.bf16.gmra.mxu0 %v231
  %v306 = vpop.f32.mrf.mxu0
  %v307 = vadd.f32 %v221, %v306
  %v308 = vpop.f32.mrf.mxu0
  %v309 = vadd.f32 %v223, %v308
  %310 = vdwg.mxu0
  %311 = vmatpush.bf16.msra.mxu0 0
  %312 = vmatpush.bf16.msra.mxu0 0
  %313 = vmatpush.bf16.msra.mxu0 0
  %314 = vmatpush.bf16.msra.mxu0 0
  %315 = vmatpush.bf16.msra.mxu0 0
  %316 = vmatpush.bf16.msra.mxu0 0
  %317 = vmatpush.bf16.msra.mxu0 %v283
  %318 = vmatpush.bf16.msra.mxu0 %v282
  %319 = vmatmul.bf16.gmra.mxu0 %v295
  %v320 = vpop.f32.mrf.mxu0
  %v321 = vadd.f32 %v307, %v320
  %v322 = vpop.f32.mrf.mxu0
  %v323 = vadd.f32 %v309, %v322
  %324 = vdwg.mxu0
  %vm327 = vcmask 1042432
  %vm328 = vcmask 1046532
  %vm329 = vmor %vm327, %vm328
  %v330 = vrot.slane %v50, 5
  %v331 = vrot.slane %v330, 4
  %v332 = vrot.slane %v51, 5
  %v333 = vsel %vm329, %v331, %v332
  %v334 = vrot.slane %v52, 5
  %v335 = vrot.slane %v334, 4
  %v336 = vrot.slane %v53, 5
  %v337 = vsel %vm329, %v335, %v336
  %s338 = scalar_lea.vmem %s2, 160
  %v339 = vld [vmem:[%s338] sm:$0xf]
  %v340 = vld [vmem:[%s338 + $0x4] sm:$0xf]
  %v341 = vld [vmem:[%s338 + $0x8] sm:$0xf]
  %v342 = vld [vmem:[%s338 + $0xc] sm:$0xf]
  %v343 = vld [vmem:[%s338 + $0x10] sm:$0xf]
  %v344 = vld [vmem:[%s338 + $0x14] sm:$0xf]
  %v345 = vld [vmem:[%s338 + $0x18] sm:$0xf]
  %v346 = vld [vmem:[%s338 + $0x1c] sm:$0xf]
  %v347 = vld [vmem:[%s338 + $0x20] sm:$0xf]
  %v348 = vld [vmem:[%s338 + $0x24] sm:$0xf]
  %v349 = vld [vmem:[%s338 + $0x28] sm:$0xf]
  %v350 = vld [vmem:[%s338 + $0x2c] sm:$0xf]
  %v351 = vld [vmem:[%s338 + $0x30] sm:$0xf]
  %v352 = vld [vmem:[%s338 + $0x34] sm:$0xf]
  %v353 = vld [vmem:[%s338 + $0x38] sm:$0xf]
  %v354 = vld [vmem:[%s338 + $0x3c] sm:$0xf]
  %v355 = vld [vmem:[%s338 + $0x40] sm:$0xf]
  %v356 = vld [vmem:[%s338 + $0x44] sm:$0xf]
  %v357 = vld [vmem:[%s338 + $0x48] sm:$0xf]
  %v358 = vld [vmem:[%s338 + $0x4c] sm:$0xf]
  %v359 = vunpack.c.l.b16 %v333
  %v360 = vunpack.c.h.b16 %v333
  %v361 = vunpack.c.l.b16 %v337
  %v362 = vunpack.c.h.b16 %v337
  %v363 = vpack.c.b16 %v361, %v359
  %v364 = vpack.c.b16 %v362, %v360
  %v386 = vunpack.c.l.b16 %v339
  %v387 = vunpack.c.l.b16 %v340
  %v388 = vunpack.c.l.b16 %v341
  %v389 = vunpack.c.l.b16 %v342
  %v390 = vunpack.c.l.b16 %v343
  %v391 = vunpack.c.l.b16 %v344
  %v392 = vunpack.c.l.b16 %v345
  %v393 = vunpack.c.l.b16 %v346
  %v394 = vunpack.c.l.b16 %v347
  %v395 = vunpack.c.l.b16 %v348
  %v396 = vunpack.c.l.b16 %v349
  %v397 = vunpack.c.l.b16 %v350
  %v398 = vunpack.c.l.b16 %v351
  %v399 = vunpack.c.l.b16 %v352
  %v400 = vunpack.c.l.b16 %v353
  %v401 = vunpack.c.l.b16 %v354
  %v402 = vunpack.c.l.b16 %v355
  %v403 = vunpack.c.l.b16 %v356
  %v404 = vunpack.c.l.b16 %v357
  %v405 = vunpack.c.l.b16 %v358
  %v406 = vpack.c.b16 %v387, %v386
  %v407 = vpack.c.b16 %v389, %v388
  %v408 = vpack.c.b16 %v391, %v390
  %v409 = vpack.c.b16 %v393, %v392
  %v410 = vpack.c.b16 %v395, %v394
  %v411 = vpack.c.b16 %v397, %v396
  %v412 = vpack.c.b16 %v399, %v398
  %v413 = vpack.c.b16 %v401, %v400
  %v414 = vpack.c.b16 %v403, %v402
  %v415 = vpack.c.b16 %v405, %v404
  %v427 = vsel %vm193, %v364, 0
  %429 = vmatpush.bf16.msra.mxu0 %v413
  %430 = vmatpush.bf16.msra.mxu0 %v412
  %431 = vmatpush.bf16.msra.mxu0 %v411
  %432 = vmatpush.bf16.msra.mxu0 %v410
  %433 = vmatpush.bf16.msra.mxu0 %v409
  %434 = vmatpush.bf16.msra.mxu0 %v408
  %435 = vmatpush.bf16.msra.mxu0 %v407
  %436 = vmatpush.bf16.msra.mxu0 %v406
  %437 = vmatmul.bf16.gmra.mxu0 %v363
  %v438 = vpop.f32.mrf.mxu0
  %v439 = vadd.f32 0.0, %v438
  %v440 = vpop.f32.mrf.mxu0
  %v441 = vadd.f32 0.0, %v440
  %442 = vdwg.mxu0
  %443 = vmatpush.bf16.msra.mxu0 0
  %444 = vmatpush.bf16.msra.mxu0 0
  %445 = vmatpush.bf16.msra.mxu0 0
  %446 = vmatpush.bf16.msra.mxu0 0
  %447 = vmatpush.bf16.msra.mxu0 0
  %448 = vmatpush.bf16.msra.mxu0 0
  %449 = vmatpush.bf16.msra.mxu0 %v415
  %450 = vmatpush.bf16.msra.mxu0 %v414
  %451 = vmatmul.bf16.gmra.mxu0 %v427
  %v452 = vpop.f32.mrf.mxu0
  %v453 = vadd.f32 %v439, %v452
  %v454 = vpop.f32.mrf.mxu0
  %v455 = vadd.f32 %v441, %v454
  %456 = vdwg.mxu0
  %v457 = vadd.f32 %v321, %v453
  %v458 = vadd.f32 %v323, %v455
  %v459 = vld [vmem:[%s7] sm:$0xff]
  %v460 = vld [vmem:[%s7 + $0x8] sm:$0xff]
  %v461 = vld [vmem:[%s7 + $0x10] sm:$0xff]
  %v462 = vld [vmem:[%s7 + $0x18] sm:$0xff]
  %v463 = vld [vmem:[%s7 + $0x20] sm:$0xff]
  %v464 = vld [vmem:[%s7 + $0x28] sm:$0xff]
  %v465 = vld [vmem:[%s7 + $0x30] sm:$0xff]
  %v466 = vld [vmem:[%s7 + $0x38] sm:$0xff]
  %vm467 = vcmask 523264
  %v468 = vsel %vm467, %v457, 0.0
  %v469 = vsel %vm467, %v458, 0.0
  %v470 = vadd.f32 %v468, %v469
  %v471 = vrot.slane %v470, 4
  %v472 = vadd.f32 %v470, %v471
  %v473 = vrot.slane %v472, 2
  %v474 = vadd.f32 %v472, %v473
  %v475 = vrot.slane %v474, 1
  %v476 = vadd.f32 %v474, %v475
  %v477 = vmul.f32 %v457, %v457
  %v478 = vmul.f32 %v458, %v458
  %v479 = vsel %vm467, %v477, 0.0
  %v480 = vsel %vm467, %v478, 0.0
  %v481 = vadd.f32 %v479, %v480
  %v482 = vrot.slane %v481, 4
  %v483 = vadd.f32 %v481, %v482
  %v484 = vrot.slane %v483, 2
  %v485 = vadd.f32 %v483, %v484
  %v486 = vrot.slane %v485, 1
  %v487 = vadd.f32 %v485, %v486
  %vm488 = vcmask 1040384
  %v489 = vsel %vm488, %v476, %v487
  %v491 = vsel %vm467, %v489, 0
  %493 = vmatpush.msra.mxu0 0.0
  %494 = vmatpush.msra.mxu0 0.0
  %495 = vmatpush.msra.mxu0 0.0
  %496 = vmatpush.msra.mxu0 0.0
  %497 = vmatpush.msra.mxu0 0.0
  %498 = vmatpush.msra.mxu0 0.0
  %499 = vmatpush.msra.mxu0 0.0
  %500 = vmatpush.msra.mxu0 0.0
  %501 = vmatpush.msra.mxu0 %v466
  %502 = vmatpush.msra.mxu0 %v465
  %503 = vmatpush.msra.mxu0 %v464
  %504 = vmatpush.msra.mxu0 %v463
  %505 = vmatpush.msra.mxu0 %v462
  %506 = vmatpush.msra.mxu0 %v461
  %507 = vmatpush.msra.mxu0 %v460
  %508 = vmatpush.msra.mxu0 %v459
  %509 = vmatmul.f32.gmra.mxu0 %v491
  %v510 = vpop.f32.mrf.mxu0
  %v511 = vadd.f32 0.0, %v510
  %512 = vdwg.mxu0
  %v513 = vmul.f32 %v511, 0.0078125
  %v514 = vmul.f32 %v513, %v513
  %v516 = vrot.slane %v514, 7
  %v518 = vsub.f32 %v513, %v516
  %v519 = vmax.f32 %v518, 0.0
  %v520 = vadd.f32 %v519, 1e-05
  %v521 = vrsqrt.pop %v520
  %v522 = vmul.f32 %v521, %v520
  %v523 = vmul.f32 %v522, %v521
  %v524 = vmul.f32 0.5, %v523
  %v525 = vsub.f32 1.5, %v524
  %v526 = vmul.f32 %v521, %v525
  %vm527 = vweird.f32 %v520
  %vm528 = vweird.f32 %v521
  %vm529 = vmor %vm527, %vm528
  %v530 = vsel %vm529, %v521, %v526
  %v532 = vrot.slane %v530, 1
  %v534 = vmul.f32 %v36, %v532
  %v535 = vmul.f32 %v513, %v534
  %v536 = vsub.f32 %v37, %v535
  %v537 = vperm.slane %v534, 0
  %v538 = vmul.f32 %v457, %v537
  %v539 = vmul.f32 %v458, %v537
  %v540 = vperm.slane %v536, 0
  %v541 = vadd.f32 %v538, %v540
  %v542 = vadd.f32 %v539, %v540
  %v543 = vmax.f32 %v541, 0.0
  %v544 = vmax.f32 %v542, 0.0
  %v545 = vpack.c.bf16 %v544, %v543
  %v546 = vld [vmem:[%s3] sm:$0xf]
  %v547 = vld [vmem:[%s3 + $0x4] sm:$0xf]
  %v548 = vld [vmem:[%s3 + $0x8] sm:$0xf]
  %v549 = vld [vmem:[%s3 + $0xc] sm:$0xf]
  %v550 = vld [vmem:[%s3 + $0x10] sm:$0xf]
  %v551 = vld [vmem:[%s3 + $0x14] sm:$0xf]
  %v552 = vld [vmem:[%s3 + $0x18] sm:$0xf]
  %v553 = vld [vmem:[%s3 + $0x1c] sm:$0xf]
  %v562 = vunpack.c.l.b16 %v546
  %v563 = vunpack.c.l.b16 %v547
  %v564 = vunpack.c.l.b16 %v548
  %v565 = vunpack.c.l.b16 %v549
  %v566 = vunpack.c.l.b16 %v550
  %v567 = vunpack.c.l.b16 %v551
  %v568 = vunpack.c.l.b16 %v552
  %v569 = vunpack.c.l.b16 %v553
  %v570 = vpack.c.b16 %v563, %v562
  %v571 = vpack.c.b16 %v565, %v564
  %v572 = vpack.c.b16 %v567, %v566
  %v573 = vpack.c.b16 %v569, %v568
  %v579 = vsel %vm467, %v545, 0
  %581 = vmatpush.bf16.msra.mxu0 0
  %582 = vmatpush.bf16.msra.mxu0 0
  %583 = vmatpush.bf16.msra.mxu0 0
  %584 = vmatpush.bf16.msra.mxu0 0
  %585 = vmatpush.bf16.msra.mxu0 %v573
  %586 = vmatpush.bf16.msra.mxu0 %v572
  %587 = vmatpush.bf16.msra.mxu0 %v571
  %588 = vmatpush.bf16.msra.mxu0 %v570
  %589 = vmatmul.bf16.gmra.mxu0 %v579
  %v590 = vpop.f32.mrf.mxu0
  %v591 = vadd.f32 0.0, %v590
  %v592 = vpop.f32.mrf.mxu0
  %v593 = vadd.f32 0.0, %v592
  %594 = vdwg.mxu0
  %v595 = vld [vmem:[%s8] sm:$0xff]
  %v596 = vld [vmem:[%s8 + $0x8] sm:$0xff]
  %v597 = vld [vmem:[%s8 + $0x10] sm:$0xff]
  %v598 = vld [vmem:[%s8 + $0x18] sm:$0xff]
  %v599 = vsel %vm193, %v591, 0.0
  %v600 = vsel %vm193, %v593, 0.0
  %v601 = vadd.f32 %v599, %v600
  %v602 = vrot.slane %v601, 4
  %v603 = vadd.f32 %v601, %v602
  %v604 = vrot.slane %v603, 2
  %v605 = vadd.f32 %v603, %v604
  %v606 = vrot.slane %v605, 1
  %v607 = vadd.f32 %v605, %v606
  %v608 = vmul.f32 %v591, %v591
  %v609 = vmul.f32 %v593, %v593
  %v610 = vsel %vm193, %v608, 0.0
  %v611 = vsel %vm193, %v609, 0.0
  %v612 = vadd.f32 %v610, %v611
  %v613 = vrot.slane %v612, 4
  %v614 = vadd.f32 %v612, %v613
  %v615 = vrot.slane %v614, 2
  %v616 = vadd.f32 %v614, %v615
  %v617 = vrot.slane %v616, 1
  %v618 = vadd.f32 %v616, %v617
  %v619 = vsel %vm488, %v607, %v618
  %v621 = vsel %vm193, %v619, 0
  %623 = vmatpush.msra.mxu0 0.0
  %624 = vmatpush.msra.mxu0 0.0
  %625 = vmatpush.msra.mxu0 0.0
  %626 = vmatpush.msra.mxu0 0.0
  %627 = vmatpush.msra.mxu0 0.0
  %628 = vmatpush.msra.mxu0 0.0
  %629 = vmatpush.msra.mxu0 0.0
  %630 = vmatpush.msra.mxu0 0.0
  %631 = vmatpush.msra.mxu0 0.0
  %632 = vmatpush.msra.mxu0 0.0
  %633 = vmatpush.msra.mxu0 0.0
  %634 = vmatpush.msra.mxu0 0.0
  %635 = vmatpush.msra.mxu0 %v598
  %636 = vmatpush.msra.mxu0 %v597
  %637 = vmatpush.msra.mxu0 %v596
  %638 = vmatpush.msra.mxu0 %v595
  %639 = vmatmul.f32.gmra.mxu0 %v621
  %v640 = vpop.f32.mrf.mxu0
  %v641 = vadd.f32 0.0, %v640
  %642 = vdwg.mxu0
  %v643 = vmul.f32 %v641, 0.0078125
  %v644 = vmul.f32 %v643, %v643
  %v646 = vrot.slane %v644, 7
  %v648 = vsub.f32 %v643, %v646
  %v649 = vmax.f32 %v648, 0.0
  %v650 = vadd.f32 %v649, 1e-05
  %v651 = vrsqrt.pop %v650
  %v652 = vmul.f32 %v651, %v650
  %v653 = vmul.f32 %v652, %v651
  %v654 = vmul.f32 0.5, %v653
  %v655 = vsub.f32 1.5, %v654
  %v656 = vmul.f32 %v651, %v655
  %vm657 = vweird.f32 %v650
  %vm658 = vweird.f32 %v651
  %vm659 = vmor %vm657, %vm658
  %v660 = vsel %vm659, %v651, %v656
  %v662 = vrot.slane %v660, 1
  %v664 = vmul.f32 %v38, %v662
  %v665 = vmul.f32 %v643, %v664
  %v666 = vsub.f32 %v39, %v665
  %v667 = vperm.slane %v664, 0
  %v668 = vmul.f32 %v591, %v667
  %v669 = vmul.f32 %v593, %v667
  %v670 = vperm.slane %v666, 0
  %v671 = vadd.f32 %v668, %v670
  %v672 = vadd.f32 %v669, %v670
  %v673 = vmax.f32 %v671, 0.0
  %v674 = vmax.f32 %v672, 0.0
  %v675 = vld [vmem:[%s1] sm:$0xff]
  %v676 = vld [vmem:[%s1 + $0x8] sm:$0xff]
  %v677 = vld [vmem:[%s1 + $0x10] sm:$0x3]
  %v678 = vld [vmem:[%s1 + $0x18] sm:$0xff]
  %v679 = vld [vmem:[%s1 + $0x20] sm:$0xff]
  %v680 = vld [vmem:[%s1 + $0x28] sm:$0x3]
  %v681 = vpack.c.bf16 %v675, %v675
  %v682 = vpack.c.bf16 %v676, %v676
  %v683 = vpack.c.bf16 %v677, %v677
  %v684 = vpack.c.bf16 %v678, %v678
  %v685 = vpack.c.bf16 %v679, %v679
  %v686 = vpack.c.bf16 %v680, %v680
  %v687 = vpack.c.bf16 %v674, %v673
  %v688 = vld [vmem:[%s4] sm:$0xf]
  %v689 = vld [vmem:[%s4 + $0x4] sm:$0xf]
  %v690 = vld [vmem:[%s4 + $0x8] sm:$0xf]
  %v691 = vld [vmem:[%s4 + $0xc] sm:$0xf]
  %v692 = vld [vmem:[%s4 + $0x10] sm:$0xf]
  %v693 = vld [vmem:[%s4 + $0x14] sm:$0xf]
  %v694 = vld [vmem:[%s4 + $0x18] sm:$0xf]
  %v695 = vld [vmem:[%s4 + $0x1c] sm:$0xf]
  %v696 = vld [vmem:[%s4 + $0x20] sm:$0xf]
  %v698 = vshrl.u32 %v681, 16
  %v700 = vrot.slane %v698, 4
  %v701 = vshll.u32 %v681, 16
  %v703 = vrot.slane %v701, 5
  %v704 = vor.u32 %v700, %v703
  %v705 = vrot.slane %v704, 4
  %v707 = vshll.u32 %v682, 16
  %v709 = vrot.slane %v707, 5
  %v710 = vsel %vm76, %v705, %v709
  %v711 = vshrl.u32 %v682, 16
  %v713 = vrot.slane %v711, 4
  %v714 = vor.u32 %v713, %v709
  %v715 = vrot.slane %v714, 4
  %v717 = vshll.u32 %v683, 16
  %v719 = vrot.slane %v717, 5
  %v720 = vsel %vm76, %v715, %v719
  %v722 = vshrl.u32 %v684, 16
  %v724 = vrot.slane %v722, 4
  %v725 = vshll.u32 %v684, 16
  %v727 = vrot.slane %v725, 5
  %v728 = vor.u32 %v724, %v727
  %v729 = vrot.slane %v728, 4
  %v731 = vshll.u32 %v685, 16
  %v733 = vrot.slane %v731, 5
  %v734 = vsel %vm76, %v729, %v733
  %v735 = vshrl.u32 %v685, 16
  %v737 = vrot.slane %v735, 4
  %v738 = vor.u32 %v737, %v733
  %v739 = vrot.slane %v738, 4
  %v741 = vshll.u32 %v686, 16
  %v743 = vrot.slane %v741, 5
  %v744 = vsel %vm76, %v739, %v743
  %s745 = scalar_lea.vmem %s4, 36
  %v746 = vld [vmem:[%s745] sm:$0xf]
  %v747 = vld [vmem:[%s745 + $0x4] sm:$0xf]
  %v748 = vld [vmem:[%s745 + $0x8] sm:$0xf]
  %v749 = vld [vmem:[%s745 + $0xc] sm:$0xf]
  %v750 = vld [vmem:[%s745 + $0x10] sm:$0xf]
  %v751 = vld [vmem:[%s745 + $0x14] sm:$0xf]
  %v752 = vld [vmem:[%s745 + $0x18] sm:$0xf]
  %v753 = vld [vmem:[%s745 + $0x1c] sm:$0xf]
  %v754 = vld [vmem:[%s745 + $0x20] sm:$0xf]
  %v755 = vunpack.c.l.b16 %v710
  %v756 = vunpack.c.l.b16 %v720
  %v757 = vunpack.c.l.b16 %v734
  %v758 = vunpack.c.l.b16 %v744
  %v759 = vpack.c.b16 %v756, %v755
  %v760 = vpack.c.b16 %v758, %v757
  %v770 = vunpack.c.l.b16 %v746
  %v771 = vunpack.c.l.b16 %v747
  %v772 = vunpack.c.l.b16 %v748
  %v773 = vunpack.c.l.b16 %v749
  %v774 = vunpack.c.l.b16 %v750
  %v775 = vunpack.c.l.b16 %v751
  %v776 = vunpack.c.l.b16 %v752
  %v777 = vunpack.c.l.b16 %v753
  %v778 = vunpack.c.l.b16 %v754
  %v779 = vpack.c.b16 %v771, %v770
  %v780 = vpack.c.b16 %v773, %v772
  %v781 = vpack.c.b16 %v775, %v774
  %v782 = vpack.c.b16 %v777, %v776
  %v783 = vpack.c.b16 %v778, %v778
  %vm788 = vcmask 588800
  %v790 = vsel %vm788, %v759, 0
  %v793 = vsel %vm788, %v760, 0
  %vm795 = vcmask 1043456
  %v797 = vsel %vm795, %v783, 0
  %799 = vmatpush.bf16.msra.mxu0 0
  %800 = vmatpush.bf16.msra.mxu0 0
  %801 = vmatpush.bf16.msra.mxu0 0
  %802 = vmatpush.bf16.msra.mxu0 %v797
  %803 = vmatpush.bf16.msra.mxu0 %v782
  %804 = vmatpush.bf16.msra.mxu0 %v781
  %805 = vmatpush.bf16.msra.mxu0 %v780
  %806 = vmatpush.bf16.msra.mxu0 %v779
  %807 = vmatmul.bf16.gmra.mxu0 %v790
  %v808 = vpop.f32.mrf.mxu0
  %v809 = vadd.f32 0.0, %v808
  %v810 = vpop.f32.mrf.mxu0
  %v811 = vadd.f32 0.0, %v810
  %812 = vmatmul.bf16.gmra.mxu0 %v793
  %v813 = vpop.f32.mrf.mxu0
  %v814 = vadd.f32 0.0, %v813
  %v815 = vpop.f32.mrf.mxu0
  %v816 = vadd.f32 0.0, %v815
  %817 = vdwg.mxu0
  %v822 = vunpack.c.l.b16 %v681
  %v823 = vunpack.c.l.b16 %v682
  %v824 = vunpack.c.l.b16 %v684
  %v825 = vunpack.c.l.b16 %v685
  %v826 = vpack.c.b16 %v823, %v822
  %v827 = vpack.c.b16 %v825, %v824
  %v837 = vunpack.c.l.b16 %v688
  %v838 = vunpack.c.l.b16 %v689
  %v839 = vunpack.c.l.b16 %v690
  %v840 = vunpack.c.l.b16 %v691
  %v841 = vunpack.c.l.b16 %v692
  %v842 = vunpack.c.l.b16 %v693
  %v843 = vunpack.c.l.b16 %v694
  %v844 = vunpack.c.l.b16 %v695
  %v845 = vunpack.c.l.b16 %v696
  %v846 = vpack.c.b16 %v838, %v837
  %v847 = vpack.c.b16 %v840, %v839
  %v848 = vpack.c.b16 %v842, %v841
  %v849 = vpack.c.b16 %v844, %v843
  %v850 = vpack.c.b16 %v845, %v845
  %v856 = vsel %vm788, %v826, 0
  %v859 = vsel %vm788, %v827, 0
  %v862 = vsel %vm795, %v850, 0
  %864 = vmatpush.bf16.msra.mxu0 0
  %865 = vmatpush.bf16.msra.mxu0 0
  %866 = vmatpush.bf16.msra.mxu0 0
  %867 = vmatpush.bf16.msra.mxu0 %v862
  %868 = vmatpush.bf16.msra.mxu0 %v849
  %869 = vmatpush.bf16.msra.mxu0 %v848
  %870 = vmatpush.bf16.msra.mxu0 %v847
  %871 = vmatpush.bf16.msra.mxu0 %v846
  %872 = vmatmul.bf16.gmra.mxu0 %v856
  %v873 = vpop.f32.mrf.mxu0
  %v874 = vadd.f32 %v809, %v873
  %v875 = vpop.f32.mrf.mxu0
  %v876 = vadd.f32 %v811, %v875
  %877 = vmatmul.bf16.gmra.mxu0 %v859
  %v878 = vpop.f32.mrf.mxu0
  %v879 = vadd.f32 %v814, %v878
  %v880 = vpop.f32.mrf.mxu0
  %v881 = vadd.f32 %v816, %v880
  %882 = vdwg.mxu0
  %v885 = vrot.slane %v681, 5
  %v886 = vrot.slane %v885, 4
  %v887 = vrot.slane %v682, 5
  %v888 = vsel %vm329, %v886, %v887
  %v889 = vrot.slane %v887, 4
  %v890 = vrot.slane %v683, 5
  %v891 = vsel %vm329, %v889, %v890
  %v892 = vrot.slane %v684, 5
  %v893 = vrot.slane %v892, 4
  %v894 = vrot.slane %v685, 5
  %v895 = vsel %vm329, %v893, %v894
  %v896 = vrot.slane %v894, 4
  %v897 = vrot.slane %v686, 5
  %v898 = vsel %vm329, %v896, %v897
  %s899 = scalar_lea.vmem %s4, 72
  %v900 = vld [vmem:[%s899] sm:$0xf]
  %v901 = vld [vmem:[%s899 + $0x4] sm:$0xf]
  %v902 = vld [vmem:[%s899 + $0x8] sm:$0xf]
  %v903 = vld [vmem:[%s899 + $0xc] sm:$0xf]
  %v904 = vld [vmem:[%s899 + $0x10] sm:$0xf]
  %v905 = vld [vmem:[%s899 + $0x14] sm:$0xf]
  %v906 = vld [vmem:[%s899 + $0x18] sm:$0xf]
  %v907 = vld [vmem:[%s899 + $0x1c] sm:$0xf]
  %v908 = vld [vmem:[%s899 + $0x20] sm:$0xf]
  %v909 = vunpack.c.l.b16 %v888
  %v910 = vunpack.c.l.b16 %v891
  %v911 = vunpack.c.l.b16 %v895
  %v912 = vunpack.c.l.b16 %v898
  %v913 = vpack.c.b16 %v910, %v909
  %v914 = vpack.c.b16 %v912, %v911
  %v924 = vunpack.c.l.b16 %v900
  %v925 = vunpack.c.l.b16 %v901
  %v926 = vunpack.c.l.b16 %v902
  %v927 = vunpack.c.l.b16 %v903
  %v928 = vunpack.c.l.b16 %v904
  %v929 = vunpack.c.l.b16 %v905
  %v930 = vunpack.c.l.b16 %v906
  %v931 = vunpack.c.l.b16 %v907
  %v932 = vunpack.c.l.b16 %v908
  %v933 = vpack.c.b16 %v925, %v924
  %v934 = vpack.c.b16 %v927, %v926
  %v935 = vpack.c.b16 %v929, %v928
  %v936 = vpack.c.b16 %v931, %v930
  %v937 = vpack.c.b16 %v932, %v932
  %v943 = vsel %vm788, %v913, 0
  %v946 = vsel %vm788, %v914, 0
  %v949 = vsel %vm795, %v937, 0
  %951 = vmatpush.bf16.msra.mxu0 0
  %952 = vmatpush.bf16.msra.mxu0 0
  %953 = vmatpush.bf16.msra.mxu0 0
  %954 = vmatpush.bf16.msra.mxu0 %v949
  %955 = vmatpush.bf16.msra.mxu0 %v936
  %956 = vmatpush.bf16.msra.mxu0 %v935
  %957 = vmatpush.bf16.msra.mxu0 %v934
  %958 = vmatpush.bf16.msra.mxu0 %v933
  %959 = vmatmul.bf16.gmra.mxu0 %v943
  %v960 = vpop.f32.mrf.mxu0
  %v961 = vadd.f32 0.0, %v960
  %v962 = vpop.f32.mrf.mxu0
  %v963 = vadd.f32 0.0, %v962
  %964 = vmatmul.bf16.gmra.mxu0 %v946
  %v965 = vpop.f32.mrf.mxu0
  %v966 = vadd.f32 0.0, %v965
  %v967 = vpop.f32.mrf.mxu0
  %v968 = vadd.f32 0.0, %v967
  %969 = vdwg.mxu0
  %v970 = vadd.f32 %v874, %v961
  %v971 = vadd.f32 %v876, %v963
  %v972 = vadd.f32 %v879, %v966
  %v973 = vadd.f32 %v881, %v968
  %v974 = vld [vmem:[%s5] sm:$0xf]
  %v975 = vld [vmem:[%s5 + $0x4] sm:$0xf]
  %v976 = vld [vmem:[%s5 + $0x8] sm:$0xf]
  %v977 = vld [vmem:[%s5 + $0xc] sm:$0xf]
  %v982 = vunpack.c.l.b16 %v974
  %v983 = vunpack.c.l.b16 %v975
  %v984 = vunpack.c.l.b16 %v976
  %v985 = vunpack.c.l.b16 %v977
  %v986 = vpack.c.b16 %v983, %v982
  %v987 = vpack.c.b16 %v985, %v984
  %v991 = vsel %vm193, %v687, 0
  %993 = vmatpush.bf16.msra.mxu0 0
  %994 = vmatpush.bf16.msra.mxu0 0
  %995 = vmatpush.bf16.msra.mxu0 0
  %996 = vmatpush.bf16.msra.mxu0 0
  %997 = vmatpush.bf16.msra.mxu0 0
  %998 = vmatpush.bf16.msra.mxu0 0
  %999 = vmatpush.bf16.msra.mxu0 %v987
  %1000 = vmatpush.bf16.msra.mxu0 %v986
  %1001 = vmatmul.bf16.gmra.mxu0 %v991
  %v1002 = vpop.f32.mrf.mxu0
  %v1003 = vadd.f32 0.0, %v1002
  %v1004 = vpop.f32.mrf.mxu0
  %v1005 = vadd.f32 0.0, %v1004
  %1006 = vdwg.mxu0
  %v1007 = vld [vmem:[%s6] sm:$0xff]
  %v1008 = vld [vmem:[%s6 + $0x8] sm:$0xff]
  %v1009 = vld [vmem:[%s6 + $0x10] sm:$0xff]
  %v1010 = vld [vmem:[%s6 + $0x18] sm:$0xff]
  %vm1011 = vcmask 130048
  %v1013 = vsel %vm1011, %v1007, 0
  %v1016 = vsel %vm1011, %v1008, 0
  %v1019 = vsel %vm1011, %v1009, 0
  %v1022 = vsel %vm1011, %v1010, 0
  %1024 = vmatpush.msra.mxu0 0.0
  %1025 = vmatpush.msra.mxu0 0.0
  %1026 = vmatpush.msra.mxu0 0.0
  %1027 = vmatpush.msra.mxu0 0.0
  %1028 = vmatpush.msra.mxu0 0.0
  %1029 = vmatpush.msra.mxu0 0.0
  %1030 = vmatpush.msra.mxu0 0.0
  %1031 = vmatpush.msra.mxu0 0.0
  %1032 = vmatpush.msra.mxu0 0.0
  %1033 = vmatpush.msra.mxu0 0.0
  %1034 = vmatpush.msra.mxu0 0.0
  %1035 = vmatpush.msra.mxu0 0.0
  %1036 = vmatpush.msra.mxu0 0.0
  %1037 = vmatpush.msra.mxu0 0.0
  %1038 = vmatpush.msra.mxu0 %v1005
  %1039 = vmatpush.msra.mxu0 %v1003
  %1040 = vmatmul.f32.gmra.mxu0 %v1013
  %v1041 = vpop.f32.mrf.mxu0
  %v1042 = vadd.f32 0.0, %v1041
  %1043 = vmatmul.f32.gmra.mxu0 %v1016
  %v1044 = vpop.f32.mrf.mxu0
  %v1045 = vadd.f32 0.0, %v1044
  %1046 = vmatmul.f32.gmra.mxu0 %v1019
  %v1047 = vpop.f32.mrf.mxu0
  %v1048 = vadd.f32 0.0, %v1047
  %1049 = vmatmul.f32.gmra.mxu0 %v1022
  %v1050 = vpop.f32.mrf.mxu0
  %v1051 = vadd.f32 0.0, %v1050
  %1052 = vdwg.mxu0
  %v1053 = vadd.f32 %v970, %v1042
  %v1054 = vadd.f32 %v971, %v1045
  %v1055 = vadd.f32 %v972, %v1048
  %v1056 = vadd.f32 %v973, %v1051
  %s1057 = scalar_lea.vmem %s5, 16
  %v1058 = vld [vmem:[%s1057] sm:$0xf]
  %v1059 = vld [vmem:[%s1057 + $0x4] sm:$0xf]
  %v1060 = vld [vmem:[%s1057 + $0x8] sm:$0xf]
  %v1061 = vld [vmem:[%s1057 + $0xc] sm:$0xf]
  %v1066 = vunpack.c.l.b16 %v1058
  %v1067 = vunpack.c.l.b16 %v1059
  %v1068 = vunpack.c.l.b16 %v1060
  %v1069 = vunpack.c.l.b16 %v1061
  %v1070 = vpack.c.b16 %v1067, %v1066
  %v1071 = vpack.c.b16 %v1069, %v1068
  %1074 = vmatpush.bf16.msra.mxu0 0
  %1075 = vmatpush.bf16.msra.mxu0 0
  %1076 = vmatpush.bf16.msra.mxu0 0
  %1077 = vmatpush.bf16.msra.mxu0 0
  %1078 = vmatpush.bf16.msra.mxu0 0
  %1079 = vmatpush.bf16.msra.mxu0 0
  %1080 = vmatpush.bf16.msra.mxu0 %v1071
  %1081 = vmatpush.bf16.msra.mxu0 %v1070
  %1082 = vmatmul.bf16.gmra.mxu0 %v991
  %v1083 = vpop.f32.mrf.mxu0
  %v1084 = vadd.f32 0.0, %v1083
  %v1085 = vpop.f32.mrf.mxu0
  %v1086 = vadd.f32 0.0, %v1085
  %1087 = vdwg.mxu0
  %s1088 = scalar_lea.vmem %s6, 32
  %v1089 = vld [vmem:[%s1088] sm:$0xff]
  %v1090 = vld [vmem:[%s1088 + $0x8] sm:$0xff]
  %v1091 = vld [vmem:[%s1088 + $0x10] sm:$0xff]
  %v1092 = vld [vmem:[%s1088 + $0x18] sm:$0xff]
  %v1094 = vsel %vm1011, %v1089, 0
  %v1097 = vsel %vm1011, %v1090, 0
  %v1100 = vsel %vm1011, %v1091, 0
  %v1103 = vsel %vm1011, %v1092, 0
  %1105 = vmatpush.msra.mxu0 0.0
  %1106 = vmatpush.msra.mxu0 0.0
  %1107 = vmatpush.msra.mxu0 0.0
  %1108 = vmatpush.msra.mxu0 0.0
  %1109 = vmatpush.msra.mxu0 0.0
  %1110 = vmatpush.msra.mxu0 0.0
  %1111 = vmatpush.msra.mxu0 0.0
  %1112 = vmatpush.msra.mxu0 0.0
  %1113 = vmatpush.msra.mxu0 0.0
  %1114 = vmatpush.msra.mxu0 0.0
  %1115 = vmatpush.msra.mxu0 0.0
  %1116 = vmatpush.msra.mxu0 0.0
  %1117 = vmatpush.msra.mxu0 0.0
  %1118 = vmatpush.msra.mxu0 0.0
  %1119 = vmatpush.msra.mxu0 %v1086
  %1120 = vmatpush.msra.mxu0 %v1084
  %1121 = vmatmul.f32.gmra.mxu0 %v1094
  %v1122 = vpop.f32.mrf.mxu0
  %v1123 = vadd.f32 0.0, %v1122
  %1124 = vmatmul.f32.gmra.mxu0 %v1097
  %v1125 = vpop.f32.mrf.mxu0
  %v1126 = vadd.f32 0.0, %v1125
  %1127 = vmatmul.f32.gmra.mxu0 %v1100
  %v1128 = vpop.f32.mrf.mxu0
  %v1129 = vadd.f32 0.0, %v1128
  %1130 = vmatmul.f32.gmra.mxu0 %v1103
  %v1131 = vpop.f32.mrf.mxu0
  %v1132 = vadd.f32 0.0, %v1131
  %1133 = vdwg.mxu0
  %v1134 = vadd.f32 %v1053, %v1123
  %v1135 = vadd.f32 %v1054, %v1126
  %v1136 = vadd.f32 %v1055, %v1129
  %v1137 = vadd.f32 %v1056, %v1132
  %s1138 = scalar_lea.vmem %s5, 32
  %v1139 = vld [vmem:[%s1138] sm:$0xf]
  %v1140 = vld [vmem:[%s1138 + $0x4] sm:$0xf]
  %v1141 = vld [vmem:[%s1138 + $0x8] sm:$0xf]
  %v1142 = vld [vmem:[%s1138 + $0xc] sm:$0xf]
  %v1147 = vunpack.c.l.b16 %v1139
  %v1148 = vunpack.c.l.b16 %v1140
  %v1149 = vunpack.c.l.b16 %v1141
  %v1150 = vunpack.c.l.b16 %v1142
  %v1151 = vpack.c.b16 %v1148, %v1147
  %v1152 = vpack.c.b16 %v1150, %v1149
  %1155 = vmatpush.bf16.msra.mxu0 0
  %1156 = vmatpush.bf16.msra.mxu0 0
  %1157 = vmatpush.bf16.msra.mxu0 0
  %1158 = vmatpush.bf16.msra.mxu0 0
  %1159 = vmatpush.bf16.msra.mxu0 0
  %1160 = vmatpush.bf16.msra.mxu0 0
  %1161 = vmatpush.bf16.msra.mxu0 %v1152
  %1162 = vmatpush.bf16.msra.mxu0 %v1151
  %1163 = vmatmul.bf16.gmra.mxu0 %v991
  %v1164 = vpop.f32.mrf.mxu0
  %v1165 = vadd.f32 0.0, %v1164
  %v1166 = vpop.f32.mrf.mxu0
  %v1167 = vadd.f32 0.0, %v1166
  %1168 = vdwg.mxu0
  %s1169 = scalar_lea.vmem %s6, 64
  %v1170 = vld [vmem:[%s1169] sm:$0xff]
  %v1171 = vld [vmem:[%s1169 + $0x8] sm:$0xff]
  %v1172 = vld [vmem:[%s1169 + $0x10] sm:$0xff]
  %v1173 = vld [vmem:[%s1169 + $0x18] sm:$0xff]
  %v1175 = vsel %vm1011, %v1170, 0
  %v1178 = vsel %vm1011, %v1171, 0
  %v1181 = vsel %vm1011, %v1172, 0
  %v1184 = vsel %vm1011, %v1173, 0
  %1186 = vmatpush.msra.mxu0 0.0
  %1187 = vmatpush.msra.mxu0 0.0
  %1188 = vmatpush.msra.mxu0 0.0
  %1189 = vmatpush.msra.mxu0 0.0
  %1190 = vmatpush.msra.mxu0 0.0
  %1191 = vmatpush.msra.mxu0 0.0
  %1192 = vmatpush.msra.mxu0 0.0
  %1193 = vmatpush.msra.mxu0 0.0
  %1194 = vmatpush.msra.mxu0 0.0
  %1195 = vmatpush.msra.mxu0 0.0
  %1196 = vmatpush.msra.mxu0 0.0
  %1197 = vmatpush.msra.mxu0 0.0
  %1198 = vmatpush.msra.mxu0 0.0
  %1199 = vmatpush.msra.mxu0 0.0
  %1200 = vmatpush.msra.mxu0 %v1167
  %1201 = vmatpush.msra.mxu0 %v1165
  %1202 = vmatmul.f32.gmra.mxu0 %v1175
  %v1203 = vpop.f32.mrf.mxu0
  %v1204 = vadd.f32 0.0, %v1203
  %1205 = vmatmul.f32.gmra.mxu0 %v1178
  %v1206 = vpop.f32.mrf.mxu0
  %v1207 = vadd.f32 0.0, %v1206
  %1208 = vmatmul.f32.gmra.mxu0 %v1181
  %v1209 = vpop.f32.mrf.mxu0
  %v1210 = vadd.f32 0.0, %v1209
  %1211 = vmatmul.f32.gmra.mxu0 %v1184
  %v1212 = vpop.f32.mrf.mxu0
  %v1213 = vadd.f32 0.0, %v1212
  %1214 = vdwg.mxu0
  %v1215 = vadd.f32 %v1134, %v1204
  %v1216 = vadd.f32 %v1135, %v1207
  %v1217 = vadd.f32 %v1136, %v1210
  %v1218 = vadd.f32 %v1137, %v1213
  %v1219 = vld [vmem:[%s7] sm:$0xff]
  %v1220 = vld [vmem:[%s7 + $0x8] sm:$0xff]
  %v1221 = vld [vmem:[%s7 + $0x10] sm:$0xff]
  %v1222 = vld [vmem:[%s7 + $0x18] sm:$0xff]
  %v1223 = vld [vmem:[%s7 + $0x20] sm:$0xff]
  %v1224 = vld [vmem:[%s7 + $0x28] sm:$0xff]
  %v1225 = vld [vmem:[%s7 + $0x30] sm:$0xff]
  %v1226 = vld [vmem:[%s7 + $0x38] sm:$0xff]
  %v1227 = vld [vmem:[%s7 + $0x40] sm:$0xff]
  %v1228 = vld [vmem:[%s7 + $0x48] sm:$0xff]
  %v1229 = vld [vmem:[%s7 + $0x50] sm:$0xff]
  %v1230 = vld [vmem:[%s7 + $0x58] sm:$0xff]
  %v1231 = vld [vmem:[%s7 + $0x60] sm:$0xff]
  %v1232 = vld [vmem:[%s7 + $0x68] sm:$0xff]
  %v1233 = vld [vmem:[%s7 + $0x70] sm:$0xff]
  %v1234 = vld [vmem:[%s7 + $0x78] sm:$0xff]
  %v1235 = vadd.f32 %v1215, %v1216
  %v1236 = vadd.f32 %v1235, %v1217
  %v1237 = vadd.f32 %v1236, %v1218
  %v1238 = vrot.slane %v1237, 4
  %v1239 = vadd.f32 %v1237, %v1238
  %v1240 = vrot.slane %v1239, 2
  %v1241 = vadd.f32 %v1239, %v1240
  %v1242 = vrot.slane %v1241, 1
  %v1243 = vadd.f32 %v1241, %v1242
  %v1244 = vmul.f32 %v1215, %v1215
  %v1245 = vmul.f32 %v1216, %v1216
  %v1246 = vmul.f32 %v1217, %v1217
  %v1247 = vmul.f32 %v1218, %v1218
  %v1248 = vadd.f32 %v1244, %v1245
  %v1249 = vadd.f32 %v1248, %v1246
  %v1250 = vadd.f32 %v1249, %v1247
  %v1251 = vrot.slane %v1250, 4
  %v1252 = vadd.f32 %v1250, %v1251
  %v1253 = vrot.slane %v1252, 2
  %v1254 = vadd.f32 %v1252, %v1253
  %v1255 = vrot.slane %v1254, 1
  %v1256 = vadd.f32 %v1254, %v1255
  %v1257 = vsel %vm488, %v1243, %v1256
  %1258 = vmatpush.msra.mxu0 %v1234
  %1259 = vmatpush.msra.mxu0 %v1233
  %1260 = vmatpush.msra.mxu0 %v1232
  %1261 = vmatpush.msra.mxu0 %v1231
  %1262 = vmatpush.msra.mxu0 %v1230
  %1263 = vmatpush.msra.mxu0 %v1229
  %1264 = vmatpush.msra.mxu0 %v1228
  %1265 = vmatpush.msra.mxu0 %v1227
  %1266 = vmatpush.msra.mxu0 %v1226
  %1267 = vmatpush.msra.mxu0 %v1225
  %1268 = vmatpush.msra.mxu0 %v1224
  %1269 = vmatpush.msra.mxu0 %v1223
  %1270 = vmatpush.msra.mxu0 %v1222
  %1271 = vmatpush.msra.mxu0 %v1221
  %1272 = vmatpush.msra.mxu0 %v1220
  %1273 = vmatpush.msra.mxu0 %v1219
  %1274 = vmatmul.f32.gmra.mxu0 %v1257
  %v1275 = vpop.f32.mrf.mxu0
  %v1276 = vadd.f32 0.0, %v1275
  %1277 = vdwg.mxu0
  %v1278 = vmul.f32 %v1276, 0.001953125
  %v1279 = vmul.f32 %v1278, %v1278
  %v1281 = vrot.slane %v1279, 7
  %v1283 = vsub.f32 %v1278, %v1281
  %v1284 = vmax.f32 %v1283, 0.0
  %v1285 = vadd.f32 %v1284, 1e-05
  %v1286 = vrsqrt.pop %v1285
  %v1287 = vmul.f32 %v1286, %v1285
  %v1288 = vmul.f32 %v1287, %v1286
  %v1289 = vmul.f32 0.5, %v1288
  %v1290 = vsub.f32 1.5, %v1289
  %v1291 = vmul.f32 %v1286, %v1290
  %vm1292 = vweird.f32 %v1285
  %vm1293 = vweird.f32 %v1286
  %vm1294 = vmor %vm1292, %vm1293
  %v1295 = vsel %vm1294, %v1286, %v1291
  %v1297 = vrot.slane %v1295, 1
  %v1299 = vmul.f32 %v40, %v1297
  %v1300 = vmul.f32 %v1278, %v1299
  %v1301 = vsub.f32 %v41, %v1300
  %v1302 = vperm.slane %v1299, 0
  %v1303 = vmul.f32 %v1215, %v1302
  %v1304 = vmul.f32 %v1216, %v1302
  %v1305 = vmul.f32 %v1217, %v1302
  %v1306 = vmul.f32 %v1218, %v1302
  %v1307 = vperm.slane %v1301, 0
  %v1308 = vadd.f32 %v1303, %v1307
  %v1309 = vadd.f32 %v1304, %v1307
  %v1310 = vadd.f32 %v1305, %v1307
  %v1311 = vadd.f32 %v1306, %v1307
  %v1312 = vmax.f32 %v1308, 0.0
  %v1313 = vmax.f32 %v1309, 0.0
  %v1314 = vmax.f32 %v1310, 0.0
  %v1315 = vmax.f32 %v1311, 0.0
  %1316 = vst [vmem:[%s10] sm:$0xff] %v1312
  %1317 = vst [vmem:[%s10 + $0x8] sm:$0xff] %v1313
  %1318 = vst [vmem:[%s10 + $0x10] sm:$0xff] %v1314
  %1319 = vst [vmem:[%s10 + $0x18] sm:$0xff] %v1315
  // Predicated region
  $region42: #{convu_forward.1} parent=0 // pred_check
    _
  $region43: #{convu_forward.1} parent=0 // pred_check_branch
    %1321 = sbr.rel (0) target = $region45
  $region44: #{convu_forward.1} parent=0 // pred_region
    _
  $region45: #{convu_forward.1} parent=0 // pred_fallthru
    _
  // Predicated region
  $region46: #{convu_forward.1} parent=0 // pred_check
    _
  $region47: #{convu_forward.1} parent=0 // pred_check_branch
    %1323 = sbr.rel (0) target = $region49
  $region48: #{convu_forward.1} parent=0 // pred_region
    _
  $region49: #{convu_forward.1} parent=0 // pred_fallthru
    _

</llo_original>
